<compile_context>
chip_gen: v5e
topology: v5e:2x2
jax: 0.10.0
libtpu: 0.0.40
codegen_flags: <defaults>
</compile_context>

<pallas_src>
import jax
import jax.numpy as jnp
from jax.experimental import pallas as pl
from jax.experimental.pallas import tpu as pltpu


def _classification_kernel(x_ref, w_ref, b_ref, o_ref):
    # x_ref: (TB, D) f32 VMEM
    # w_ref: (1, D)  f32 VMEM (resident across grid steps)
    # b_ref: (1, 1)  f32 SMEM scalar
    # o_ref: (1, TB) f32 VMEM (lane-dense output block)
    x = x_ref[...]                                   # (TB, D)
    w = w_ref[...]                                   # (1, D) -> broadcast over sublanes
    logits = jnp.sum(x * w, axis=-1)                 # VPU mul + XLU reduce -> (TB,)
    z = logits + b_ref[0, 0]                         # scalar bias from SMEM
    y = jax.nn.sigmoid(z)                            # EUP exp + recip
    o_ref[...] = y.reshape(1, -1).astype(o_ref.dtype)


def classification_forward(x, w, b, *, block_rows=512):
    """Logistic-regression forward.

    x: (B, D) f32
    w: (1, D) f32   (PyTorch nn.Linear(input_size, 1) weight layout)
    b: any shape with 1 element (nn.Linear bias)
    returns: (B, 1) f32  == sigmoid(x @ w.T + b)
    """
    B, D = x.shape
    assert w.shape == (1, D), f"expected weight (1, {D}), got {w.shape}"

    TB = int(block_rows)
    assert TB % 128 == 0, "block_rows must be a multiple of 128 (lane-dense output)"

    b2 = jnp.asarray(b, dtype=x.dtype).reshape(1, 1)

    num_blocks = pl.cdiv(B, TB)
    B_pad = num_blocks * TB
    if B_pad != B:
        # Zero-pad the batch; padded rows compute sigmoid(b) and are sliced off.
        x = jnp.pad(x, ((0, B_pad - B), (0, 0)))

    out = pl.pallas_call(
        _classification_kernel,
        out_shape=jax.ShapeDtypeStruct((1, B_pad), x.dtype),
        grid=(num_blocks,),
        in_specs=[
            # x: one (TB, D) batch tile per grid step
            pl.BlockSpec((TB, D), lambda i: (i, 0)),
            # weight: full (1, D) row, resident across all grid steps
            pl.BlockSpec((1, D), lambda i: (0, 0)),
            # bias: scalar in SMEM (no VMEM tile, no extra DMA per step)
            pl.BlockSpec(memory_space=pltpu.MemorySpace.SMEM),
        ],
        # lane-dense output: (1, TB) block at lane offset i*TB
        out_specs=pl.BlockSpec((1, TB), lambda i: (0, i)),
        compiler_params=pltpu.CompilerParams(
            dimension_semantics=("parallel",),
        ),
    )(x, w, b2)

    # (1, B_pad) -> (B, 1): pure layout plumbing outside the kernel.
    return out.reshape(B_pad, 1)[:B]


def _reference(x, w, b):
    return jax.nn.sigmoid(x @ w.T + jnp.asarray(b).reshape(1, 1))


if __name__ == "__main__":
    key = jax.random.PRNGKey(0)
    kx, kw, kb = jax.random.split(key, 3)

    batch = 8
    input_size = 32

    # Shapes match nn.Linear(input_size, 1): weight (1, D), bias (1,).
    x = jax.random.normal(kx, (batch, input_size), dtype=jnp.float32)
    w = jax.random.normal(kw, (1, input_size), dtype=jnp.float32) * 0.1
    b = jax.random.normal(kb, (1,), dtype=jnp.float32) * 0.1

    out = classification_forward(x, w, b)
    out = jax.block_until_ready(out)

    ref = _reference(x, w, b)
    assert out.shape == (batch, 1), out.shape
    assert jnp.allclose(out, ref, atol=1e-5, rtol=1e-5), "mismatch vs reference"

    print("KERNEL_OK")
</pallas_src>

<mosaic_0001>
module attributes {stable_mosaic.version = 11 : i64} {
  func.func @_classification_kernel(%arg0: i32, %arg1: memref<512x32xf32, #tpu.memory_space<vmem>>, %arg2: memref<1x32xf32, #tpu.memory_space<vmem>>, %arg3: memref<1x1xf32, #tpu.memory_space<smem>>, %arg4: memref<1x512xf32, #tpu.memory_space<vmem>>) attributes {dimension_semantics = [#tpu.dimension_semantics<parallel>], iteration_bounds = array<i64: 1>, scalar_prefetch = 0 : i64, scratch_operands = 0 : i64, tpu.core_type = #tpu.core_type<tc>, window_params = [{transform_indices = @transform_0, window_bounds = array<i64: 512, 32>}, {pipeline_mode = #tpu.pipeline_mode<synchronous>, transform_indices = @transform_1, window_bounds = array<i64: 1, 32>}, {transform_indices = @transform_2, window_bounds = array<i64: 1, 1>}, {transform_indices = @transform_3, window_bounds = array<i64: 1, 512>}]} {
    %c0 = arith.constant 0 : index
    %c0_0 = arith.constant 0 : index
    %0 = vector.load %arg1[%c0, %c0_0] : memref<512x32xf32, #tpu.memory_space<vmem>>, vector<512x32xf32>
    %c0_1 = arith.constant 0 : index
    %c0_2 = arith.constant 0 : index
    %1 = vector.load %arg2[%c0_1, %c0_2] : memref<1x32xf32, #tpu.memory_space<vmem>>, vector<1x32xf32>
    %2 = vector.broadcast %1 : vector<1x32xf32> to vector<512x32xf32>
    %3 = arith.mulf %0, %2 : vector<512x32xf32>
    %cst = arith.constant dense<0.000000e+00> : vector<512xf32>
    %4 = vector.multi_reduction <add>, %3, %cst [1] : vector<512x32xf32> to vector<512xf32>
    %c0_3 = arith.constant 0 : index
    %c0_4 = arith.constant 0 : index
    %5 = memref.load %arg3[%c0_3, %c0_4] : memref<1x1xf32, #tpu.memory_space<smem>>
    %6 = vector.broadcast %5 : f32 to vector<512xf32>
    %7 = arith.addf %4, %6 : vector<512xf32>
    %8 = arith.negf %7 : vector<512xf32>
    %9 = math.exp %8 : vector<512xf32>
    %cst_5 = arith.constant 1.000000e+00 : f32
    %10 = vector.broadcast %cst_5 : f32 to vector<512xf32>
    %11 = arith.addf %10, %9 : vector<512xf32>
    %12 = arith.divf %10, %11 : vector<512xf32>
    %13 = vector.shape_cast %12 : vector<512xf32> to vector<1x512xf32>
    %c0_6 = arith.constant 0 : index
    %c0_7 = arith.constant 0 : index
    %14 = vector.load %arg4[%c0_6, %c0_7] : memref<1x512xf32, #tpu.memory_space<vmem>>, vector<1x512xf32>
    tpu.vector_store %arg4[%c0_6, %c0_7], %13 {strides = array<i32>} : memref<1x512xf32, #tpu.memory_space<vmem>>, vector<1x512xf32>,
    return
  }
  func.func @transform_0(%arg0: i32) -> (i32, i32) {
    %c0_i32 = arith.constant 0 : i32
    %c0_i32_0 = arith.constant 0 : i32
    return %arg0, %c0_i32 : i32, i32
  }
  func.func @transform_1(%arg0: i32) -> (i32, i32) {
    %c0_i32 = arith.constant 0 : i32
    %c0_i32_0 = arith.constant 0 : i32
    %c0_i32_1 = arith.constant 0 : i32
    return %c0_i32, %c0_i32_0 : i32, i32
  }
  func.func @transform_2(%arg0: i32) -> (i32, i32) {
    %c0_i32 = arith.constant 0 : i32
    %c0_i32_0 = arith.constant 0 : i32
    %c0_i32_1 = arith.constant 0 : i32
    return %c0_i32, %c0_i32_0 : i32, i32
  }
  func.func @transform_3(%arg0: i32) -> (i32, i32) {
    %c0_i32 = arith.constant 0 : i32
    %c0_i32_0 = arith.constant 0 : i32
    return %c0_i32, %arg0 : i32, i32
  }
}

</mosaic_0001>

<llo_original>
// kernel: tpu_custom_call.1
$region0: #{tpu_custom_call.1}
  #allocation0 [shape = 'u32[]', space=smem, size = 0x4, offset = 0x4, fixed_abs, tag = 'smem constant byte address 0x4 - core index']
  #allocation1 [shape = 'u32[72,128]{1,0:T(1,128)}', space=vmem, size = 0x9000, scoped, tag = 'internal scratch']
  #allocation2 [shape = 'f32[1,1]{1,0:T(1,128)S(6)}', space=smem, size = 0x200, scoped, tag = 'scoped memory for tpu_custom_call.1']
  %s0 = inlined_call_operand.vmem [shape: f32[512,32], index: 0, kind: input, shape index: {}]
  %s1 = inlined_call_operand.vmem [shape: f32[1,32], index: 1, kind: input, shape index: {}]
  %s2 = inlined_call_operand.<no memory space> [shape: f32[1,1], index: 2, kind: input, shape index: {}]
  %s3 = inlined_call_operand.hbm [shape: f32[1,512], index: 3, kind: output, shape index: {}]
  %s4 = sld [smem:[#allocation0]]
  $region22: #{tpu_custom_call.1} parent=0
    _
  %s6 = ssub.s32 1, %s4
  %s7 = scalar_select 0, %s6, %s4
  %8 = sst [smem:[#allocation2]] %s2
  $region1: #{tpu_custom_call.1} parent=0
    #allocation3 [shape = 'u8[2048]{0}', space=vmem, size = 0x800, scoped, tag = 'output window, operand 0, single buffered']
    #allocation4 [shape = 's32[1]{0}', space=sflag, size = 0x4, scoped, tag = 'scoped memory for tpu_custom_call.1']
    %9 = vsyncpa [#allocation4], 0
    // Predicated region
    $region2: #{tpu_custom_call.1} parent=1 // pred_check
      _
    $region3: #{tpu_custom_call.1} parent=1 // pred_check_branch
      %11 = sbr.rel (0) target = $region5
    $region4: #{tpu_custom_call.1} parent=1 // pred_region
      _
    $region5: #{tpu_custom_call.1} parent=1 // pred_fallthru
      _
    // Predicated region
    $region6: #{tpu_custom_call.1} parent=1 // pred_check
      _
    $region7: #{tpu_custom_call.1} parent=1 // pred_check_branch
      %13 = sbr.rel (0) target = $region9
    $region8: #{tpu_custom_call.1} parent=1 // pred_region
      _
    $region9: #{tpu_custom_call.1} parent=1 // pred_fallthru
      _
    // Predicated region
    $region10: #{tpu_custom_call.1} parent=1 // pred_check
      _
    $region11: #{tpu_custom_call.1} parent=1 // pred_check_branch
      %15 = sbr.rel (0) target = $region13
    $region12: #{tpu_custom_call.1} parent=1 // pred_region
      _
    $region13: #{tpu_custom_call.1} parent=1 // pred_fallthru
      _
    %v16 = vld [vmem:[%s0] sm:$0xff]
    %v17 = vld [vmem:[%s0 + $0x8] sm:$0xff]
    %v18 = vld [vmem:[%s0 + $0x10] sm:$0xff]
    %v19 = vld [vmem:[%s0 + $0x18] sm:$0xff]
    %v20 = vld [vmem:[%s0 + $0x20] sm:$0xff]
    %v21 = vld [vmem:[%s0 + $0x28] sm:$0xff]
    %v22 = vld [vmem:[%s0 + $0x30] sm:$0xff]
    %v23 = vld [vmem:[%s0 + $0x38] sm:$0xff]
    %v24 = vld [vmem:[%s0 + $0x40] sm:$0xff]
    %v25 = vld [vmem:[%s0 + $0x48] sm:$0xff]
    %v26 = vld [vmem:[%s0 + $0x50] sm:$0xff]
    %v27 = vld [vmem:[%s0 + $0x58] sm:$0xff]
    %v28 = vld [vmem:[%s0 + $0x60] sm:$0xff]
    %v29 = vld [vmem:[%s0 + $0x68] sm:$0xff]
    %v30 = vld [vmem:[%s0 + $0x70] sm:$0xff]
    %v31 = vld [vmem:[%s0 + $0x78] sm:$0xff]
    %v32 = vld [vmem:[%s0 + $0x80] sm:$0xff]
    %v33 = vld [vmem:[%s0 + $0x88] sm:$0xff]
    %v34 = vld [vmem:[%s0 + $0x90] sm:$0xff]
    %v35 = vld [vmem:[%s0 + $0x98] sm:$0xff]
    %v36 = vld [vmem:[%s0 + $0xa0] sm:$0xff]
    %v37 = vld [vmem:[%s0 + $0xa8] sm:$0xff]
    %v38 = vld [vmem:[%s0 + $0xb0] sm:$0xff]
    %v39 = vld [vmem:[%s0 + $0xb8] sm:$0xff]
    %v40 = vld [vmem:[%s0 + $0xc0] sm:$0xff]
    %v41 = vld [vmem:[%s0 + $0xc8] sm:$0xff]
    %v42 = vld [vmem:[%s0 + $0xd0] sm:$0xff]
    %v43 = vld [vmem:[%s0 + $0xd8] sm:$0xff]
    %v44 = vld [vmem:[%s0 + $0xe0] sm:$0xff]
    %v45 = vld [vmem:[%s0 + $0xe8] sm:$0xff]
    %v46 = vld [vmem:[%s0 + $0xf0] sm:$0xff]
    %v47 = vld [vmem:[%s0 + $0xf8] sm:$0xff]
    %v48 = vld [vmem:[%s0 + $0x100] sm:$0xff]
    %v49 = vld [vmem:[%s0 + $0x108] sm:$0xff]
    %v50 = vld [vmem:[%s0 + $0x110] sm:$0xff]
    %v51 = vld [vmem:[%s0 + $0x118] sm:$0xff]
    %v52 = vld [vmem:[%s0 + $0x120] sm:$0xff]
    %v53 = vld [vmem:[%s0 + $0x128] sm:$0xff]
    %v54 = vld [vmem:[%s0 + $0x130] sm:$0xff]
    %v55 = vld [vmem:[%s0 + $0x138] sm:$0xff]
    %v56 = vld [vmem:[%s0 + $0x140] sm:$0xff]
    %v57 = vld [vmem:[%s0 + $0x148] sm:$0xff]
    %v58 = vld [vmem:[%s0 + $0x150] sm:$0xff]
    %v59 = vld [vmem:[%s0 + $0x158] sm:$0xff]
    %v60 = vld [vmem:[%s0 + $0x160] sm:$0xff]
    %v61 = vld [vmem:[%s0 + $0x168] sm:$0xff]
    %v62 = vld [vmem:[%s0 + $0x170] sm:$0xff]
    %v63 = vld [vmem:[%s0 + $0x178] sm:$0xff]
    %v64 = vld [vmem:[%s0 + $0x180] sm:$0xff]
    %v65 = vld [vmem:[%s0 + $0x188] sm:$0xff]
    %v66 = vld [vmem:[%s0 + $0x190] sm:$0xff]
    %v67 = vld [vmem:[%s0 + $0x198] sm:$0xff]
    %v68 = vld [vmem:[%s0 + $0x1a0] sm:$0xff]
    %v69 = vld [vmem:[%s0 + $0x1a8] sm:$0xff]
    %v70 = vld [vmem:[%s0 + $0x1b0] sm:$0xff]
    %v71 = vld [vmem:[%s0 + $0x1b8] sm:$0xff]
    %v72 = vld [vmem:[%s0 + $0x1c0] sm:$0xff]
    %v73 = vld [vmem:[%s0 + $0x1c8] sm:$0xff]
    %v74 = vld [vmem:[%s0 + $0x1d0] sm:$0xff]
    %v75 = vld [vmem:[%s0 + $0x1d8] sm:$0xff]
    %v76 = vld [vmem:[%s0 + $0x1e0] sm:$0xff]
    %v77 = vld [vmem:[%s0 + $0x1e8] sm:$0xff]
    %v78 = vld [vmem:[%s0 + $0x1f0] sm:$0xff]
    %v79 = vld [vmem:[%s0 + $0x1f8] sm:$0xff]
    %v80 = vld [vmem:[%s1] sm:$0x1]
    %v82 = vperm.slane %v80, 0
    %v84 = vmul.f32 %v16, %v82
    %v85 = vmul.f32 %v17, %v82
    %v86 = vmul.f32 %v18, %v82
    %v87 = vmul.f32 %v19, %v82
    %v88 = vmul.f32 %v20, %v82
    %v89 = vmul.f32 %v21, %v82
    %v90 = vmul.f32 %v22, %v82
    %v91 = vmul.f32 %v23, %v82
    %v92 = vmul.f32 %v24, %v82
    %v93 = vmul.f32 %v25, %v82
    %v94 = vmul.f32 %v26, %v82
    %v95 = vmul.f32 %v27, %v82
    %v96 = vmul.f32 %v28, %v82
    %v97 = vmul.f32 %v29, %v82
    %v98 = vmul.f32 %v30, %v82
    %v99 = vmul.f32 %v31, %v82
    %v100 = vmul.f32 %v32, %v82
    %v101 = vmul.f32 %v33, %v82
    %v102 = vmul.f32 %v34, %v82
    %v103 = vmul.f32 %v35, %v82
    %v104 = vmul.f32 %v36, %v82
    %v105 = vmul.f32 %v37, %v82
    %v106 = vmul.f32 %v38, %v82
    %v107 = vmul.f32 %v39, %v82
    %v108 = vmul.f32 %v40, %v82
    %v109 = vmul.f32 %v41, %v82
    %v110 = vmul.f32 %v42, %v82
    %v111 = vmul.f32 %v43, %v82
    %v112 = vmul.f32 %v44, %v82
    %v113 = vmul.f32 %v45, %v82
    %v114 = vmul.f32 %v46, %v82
    %v115 = vmul.f32 %v47, %v82
    %v116 = vmul.f32 %v48, %v82
    %v117 = vmul.f32 %v49, %v82
    %v118 = vmul.f32 %v50, %v82
    %v119 = vmul.f32 %v51, %v82
    %v120 = vmul.f32 %v52, %v82
    %v121 = vmul.f32 %v53, %v82
    %v122 = vmul.f32 %v54, %v82
    %v123 = vmul.f32 %v55, %v82
    %v124 = vmul.f32 %v56, %v82
    %v125 = vmul.f32 %v57, %v82
    %v126 = vmul.f32 %v58, %v82
    %v127 = vmul.f32 %v59, %v82
    %v128 = vmul.f32 %v60, %v82
    %v129 = vmul.f32 %v61, %v82
    %v130 = vmul.f32 %v62, %v82
    %v131 = vmul.f32 %v63, %v82
    %v132 = vmul.f32 %v64, %v82
    %v133 = vmul.f32 %v65, %v82
    %v134 = vmul.f32 %v66, %v82
    %v135 = vmul.f32 %v67, %v82
    %v136 = vmul.f32 %v68, %v82
    %v137 = vmul.f32 %v69, %v82
    %v138 = vmul.f32 %v70, %v82
    %v139 = vmul.f32 %v71, %v82
    %v140 = vmul.f32 %v72, %v82
    %v141 = vmul.f32 %v73, %v82
    %v142 = vmul.f32 %v74, %v82
    %v143 = vmul.f32 %v75, %v82
    %v144 = vmul.f32 %v76, %v82
    %v145 = vmul.f32 %v77, %v82
    %v146 = vmul.f32 %v78, %v82
    %v147 = vmul.f32 %v79, %v82
    %vm148 = vcmask 261120
    %v149 = vsel %vm148, %v84, 0.0
    %150 = vadd.xlane.f32.xlu0 %v149
    %v151 = vpop.xlane.xlu0 %150
    %v152 = vsel %vm148, %v85, 0.0
    %153 = vadd.xlane.f32.xlu0 %v152
    %v154 = vpop.xlane.xlu0 %153
    %v155 = vsel %vm148, %v86, 0.0
    %156 = vadd.xlane.f32.xlu0 %v155
    %v157 = vpop.xlane.xlu0 %156
    %v158 = vsel %vm148, %v87, 0.0
    %159 = vadd.xlane.f32.xlu0 %v158
    %v160 = vpop.xlane.xlu0 %159
    %v161 = vsel %vm148, %v88, 0.0
    %162 = vadd.xlane.f32.xlu0 %v161
    %v163 = vpop.xlane.xlu0 %162
    %v164 = vsel %vm148, %v89, 0.0
    %165 = vadd.xlane.f32.xlu0 %v164
    %v166 = vpop.xlane.xlu0 %165
    %v167 = vsel %vm148, %v90, 0.0
    %168 = vadd.xlane.f32.xlu0 %v167
    %v169 = vpop.xlane.xlu0 %168
    %v170 = vsel %vm148, %v91, 0.0
    %171 = vadd.xlane.f32.xlu0 %v170
    %v172 = vpop.xlane.xlu0 %171
    %v173 = vsel %vm148, %v92, 0.0
    %174 = vadd.xlane.f32.xlu0 %v173
    %v175 = vpop.xlane.xlu0 %174
    %v176 = vsel %vm148, %v93, 0.0
    %177 = vadd.xlane.f32.xlu0 %v176
    %v178 = vpop.xlane.xlu0 %177
    %v179 = vsel %vm148, %v94, 0.0
    %180 = vadd.xlane.f32.xlu0 %v179
    %v181 = vpop.xlane.xlu0 %180
    %v182 = vsel %vm148, %v95, 0.0
    %183 = vadd.xlane.f32.xlu0 %v182
    %v184 = vpop.xlane.xlu0 %183
    %v185 = vsel %vm148, %v96, 0.0
    %186 = vadd.xlane.f32.xlu0 %v185
    %v187 = vpop.xlane.xlu0 %186
    %v188 = vsel %vm148, %v97, 0.0
    %189 = vadd.xlane.f32.xlu0 %v188
    %v190 = vpop.xlane.xlu0 %189
    %v191 = vsel %vm148, %v98, 0.0
    %192 = vadd.xlane.f32.xlu0 %v191
    %v193 = vpop.xlane.xlu0 %192
    %v194 = vsel %vm148, %v99, 0.0
    %195 = vadd.xlane.f32.xlu0 %v194
    %v196 = vpop.xlane.xlu0 %195
    %v197 = vsel %vm148, %v100, 0.0
    %198 = vadd.xlane.f32.xlu0 %v197
    %v199 = vpop.xlane.xlu0 %198
    %v200 = vsel %vm148, %v101, 0.0
    %201 = vadd.xlane.f32.xlu0 %v200
    %v202 = vpop.xlane.xlu0 %201
    %v203 = vsel %vm148, %v102, 0.0
    %204 = vadd.xlane.f32.xlu0 %v203
    %v205 = vpop.xlane.xlu0 %204
    %v206 = vsel %vm148, %v103, 0.0
    %207 = vadd.xlane.f32.xlu0 %v206
    %v208 = vpop.xlane.xlu0 %207
    %v209 = vsel %vm148, %v104, 0.0
    %210 = vadd.xlane.f32.xlu0 %v209
    %v211 = vpop.xlane.xlu0 %210
    %v212 = vsel %vm148, %v105, 0.0
    %213 = vadd.xlane.f32.xlu0 %v212
    %v214 = vpop.xlane.xlu0 %213
    %v215 = vsel %vm148, %v106, 0.0
    %216 = vadd.xlane.f32.xlu0 %v215
    %v217 = vpop.xlane.xlu0 %216
    %v218 = vsel %vm148, %v107, 0.0
    %219 = vadd.xlane.f32.xlu0 %v218
    %v220 = vpop.xlane.xlu0 %219
    %v221 = vsel %vm148, %v108, 0.0
    %222 = vadd.xlane.f32.xlu0 %v221
    %v223 = vpop.xlane.xlu0 %222
    %v224 = vsel %vm148, %v109, 0.0
    %225 = vadd.xlane.f32.xlu0 %v224
    %v226 = vpop.xlane.xlu0 %225
    %v227 = vsel %vm148, %v110, 0.0
    %228 = vadd.xlane.f32.xlu0 %v227
    %v229 = vpop.xlane.xlu0 %228
    %v230 = vsel %vm148, %v111, 0.0
    %231 = vadd.xlane.f32.xlu0 %v230
    %v232 = vpop.xlane.xlu0 %231
    %v233 = vsel %vm148, %v112, 0.0
    %234 = vadd.xlane.f32.xlu0 %v233
    %v235 = vpop.xlane.xlu0 %234
    %v236 = vsel %vm148, %v113, 0.0
    %237 = vadd.xlane.f32.xlu0 %v236
    %v238 = vpop.xlane.xlu0 %237
    %v239 = vsel %vm148, %v114, 0.0
    %240 = vadd.xlane.f32.xlu0 %v239
    %v241 = vpop.xlane.xlu0 %240
    %v242 = vsel %vm148, %v115, 0.0
    %243 = vadd.xlane.f32.xlu0 %v242
    %v244 = vpop.xlane.xlu0 %243
    %v245 = vsel %vm148, %v116, 0.0
    %246 = vadd.xlane.f32.xlu0 %v245
    %v247 = vpop.xlane.xlu0 %246
    %v248 = vsel %vm148, %v117, 0.0
    %249 = vadd.xlane.f32.xlu0 %v248
    %v250 = vpop.xlane.xlu0 %249
    %v251 = vsel %vm148, %v118, 0.0
    %252 = vadd.xlane.f32.xlu0 %v251
    %v253 = vpop.xlane.xlu0 %252
    %v254 = vsel %vm148, %v119, 0.0
    %255 = vadd.xlane.f32.xlu0 %v254
    %v256 = vpop.xlane.xlu0 %255
    %v257 = vsel %vm148, %v120, 0.0
    %258 = vadd.xlane.f32.xlu0 %v257
    %v259 = vpop.xlane.xlu0 %258
    %v260 = vsel %vm148, %v121, 0.0
    %261 = vadd.xlane.f32.xlu0 %v260
    %v262 = vpop.xlane.xlu0 %261
    %v263 = vsel %vm148, %v122, 0.0
    %264 = vadd.xlane.f32.xlu0 %v263
    %v265 = vpop.xlane.xlu0 %264
    %v266 = vsel %vm148, %v123, 0.0
    %267 = vadd.xlane.f32.xlu0 %v266
    %v268 = vpop.xlane.xlu0 %267
    %v269 = vsel %vm148, %v124, 0.0
    %270 = vadd.xlane.f32.xlu0 %v269
    %v271 = vpop.xlane.xlu0 %270
    %v272 = vsel %vm148, %v125, 0.0
    %273 = vadd.xlane.f32.xlu0 %v272
    %v274 = vpop.xlane.xlu0 %273
    %v275 = vsel %vm148, %v126, 0.0
    %276 = vadd.xlane.f32.xlu0 %v275
    %v277 = vpop.xlane.xlu0 %276
    %v278 = vsel %vm148, %v127, 0.0
    %279 = vadd.xlane.f32.xlu0 %v278
    %v280 = vpop.xlane.xlu0 %279
    %v281 = vsel %vm148, %v128, 0.0
    %282 = vadd.xlane.f32.xlu0 %v281
    %v283 = vpop.xlane.xlu0 %282
    %v284 = vsel %vm148, %v129, 0.0
    %285 = vadd.xlane.f32.xlu0 %v284
    %v286 = vpop.xlane.xlu0 %285
    %v287 = vsel %vm148, %v130, 0.0
    %288 = vadd.xlane.f32.xlu0 %v287
    %v289 = vpop.xlane.xlu0 %288
    %v290 = vsel %vm148, %v131, 0.0
    %291 = vadd.xlane.f32.xlu0 %v290
    %v292 = vpop.xlane.xlu0 %291
    %v293 = vsel %vm148, %v132, 0.0
    %294 = vadd.xlane.f32.xlu0 %v293
    %v295 = vpop.xlane.xlu0 %294
    %v296 = vsel %vm148, %v133, 0.0
    %297 = vadd.xlane.f32.xlu0 %v296
    %v298 = vpop.xlane.xlu0 %297
    %v299 = vsel %vm148, %v134, 0.0
    %300 = vadd.xlane.f32.xlu0 %v299
    %v301 = vpop.xlane.xlu0 %300
    %v302 = vsel %vm148, %v135, 0.0
    %303 = vadd.xlane.f32.xlu0 %v302
    %v304 = vpop.xlane.xlu0 %303
    %v305 = vsel %vm148, %v136, 0.0
    %306 = vadd.xlane.f32.xlu0 %v305
    %v307 = vpop.xlane.xlu0 %306
    %v308 = vsel %vm148, %v137, 0.0
    %309 = vadd.xlane.f32.xlu0 %v308
    %v310 = vpop.xlane.xlu0 %309
    %v311 = vsel %vm148, %v138, 0.0
    %312 = vadd.xlane.f32.xlu0 %v311
    %v313 = vpop.xlane.xlu0 %312
    %v314 = vsel %vm148, %v139, 0.0
    %315 = vadd.xlane.f32.xlu0 %v314
    %v316 = vpop.xlane.xlu0 %315
    %v317 = vsel %vm148, %v140, 0.0
    %318 = vadd.xlane.f32.xlu0 %v317
    %v319 = vpop.xlane.xlu0 %318
    %v320 = vsel %vm148, %v141, 0.0
    %321 = vadd.xlane.f32.xlu0 %v320
    %v322 = vpop.xlane.xlu0 %321
    %v323 = vsel %vm148, %v142, 0.0
    %324 = vadd.xlane.f32.xlu0 %v323
    %v325 = vpop.xlane.xlu0 %324
    %v326 = vsel %vm148, %v143, 0.0
    %327 = vadd.xlane.f32.xlu0 %v326
    %v328 = vpop.xlane.xlu0 %327
    %v329 = vsel %vm148, %v144, 0.0
    %330 = vadd.xlane.f32.xlu0 %v329
    %v331 = vpop.xlane.xlu0 %330
    %v332 = vsel %vm148, %v145, 0.0
    %333 = vadd.xlane.f32.xlu0 %v332
    %v334 = vpop.xlane.xlu0 %333
    %v335 = vsel %vm148, %v146, 0.0
    %336 = vadd.xlane.f32.xlu0 %v335
    %v337 = vpop.xlane.xlu0 %336
    %v338 = vsel %vm148, %v147, 0.0
    %339 = vadd.xlane.f32.xlu0 %v338
    %v340 = vpop.xlane.xlu0 %339
    %s341 = sld [smem:[#allocation2]]
    %v342 = vstv %s341
    %v343 = vadd.f32 %v151, %v342
    %v344 = vadd.f32 %v154, %v342
    %v345 = vadd.f32 %v157, %v342
    %v346 = vadd.f32 %v160, %v342
    %v347 = vadd.f32 %v163, %v342
    %v348 = vadd.f32 %v166, %v342
    %v349 = vadd.f32 %v169, %v342
    %v350 = vadd.f32 %v172, %v342
    %v351 = vadd.f32 %v175, %v342
    %v352 = vadd.f32 %v178, %v342
    %v353 = vadd.f32 %v181, %v342
    %v354 = vadd.f32 %v184, %v342
    %v355 = vadd.f32 %v187, %v342
    %v356 = vadd.f32 %v190, %v342
    %v357 = vadd.f32 %v193, %v342
    %v358 = vadd.f32 %v196, %v342
    %v359 = vadd.f32 %v199, %v342
    %v360 = vadd.f32 %v202, %v342
    %v361 = vadd.f32 %v205, %v342
    %v362 = vadd.f32 %v208, %v342
    %v363 = vadd.f32 %v211, %v342
    %v364 = vadd.f32 %v214, %v342
    %v365 = vadd.f32 %v217, %v342
    %v366 = vadd.f32 %v220, %v342
    %v367 = vadd.f32 %v223, %v342
    %v368 = vadd.f32 %v226, %v342
    %v369 = vadd.f32 %v229, %v342
    %v370 = vadd.f32 %v232, %v342
    %v371 = vadd.f32 %v235, %v342
    %v372 = vadd.f32 %v238, %v342
    %v373 = vadd.f32 %v241, %v342
    %v374 = vadd.f32 %v244, %v342
    %v375 = vadd.f32 %v247, %v342
    %v376 = vadd.f32 %v250, %v342
    %v377 = vadd.f32 %v253, %v342
    %v378 = vadd.f32 %v256, %v342
    %v379 = vadd.f32 %v259, %v342
    %v380 = vadd.f32 %v262, %v342
    %v381 = vadd.f32 %v265, %v342
    %v382 = vadd.f32 %v268, %v342
    %v383 = vadd.f32 %v271, %v342
    %v384 = vadd.f32 %v274, %v342
    %v385 = vadd.f32 %v277, %v342
    %v386 = vadd.f32 %v280, %v342
    %v387 = vadd.f32 %v283, %v342
    %v388 = vadd.f32 %v286, %v342
    %v389 = vadd.f32 %v289, %v342
    %v390 = vadd.f32 %v292, %v342
    %v391 = vadd.f32 %v295, %v342
    %v392 = vadd.f32 %v298, %v342
    %v393 = vadd.f32 %v301, %v342
    %v394 = vadd.f32 %v304, %v342
    %v395 = vadd.f32 %v307, %v342
    %v396 = vadd.f32 %v310, %v342
    %v397 = vadd.f32 %v313, %v342
    %v398 = vadd.f32 %v316, %v342
    %v399 = vadd.f32 %v319, %v342
    %v400 = vadd.f32 %v322, %v342
    %v401 = vadd.f32 %v325, %v342
    %v402 = vadd.f32 %v328, %v342
    %v403 = vadd.f32 %v331, %v342
    %v404 = vadd.f32 %v334, %v342
    %v405 = vadd.f32 %v337, %v342
    %v406 = vadd.f32 %v340, %v342
    %v407 = vxor.u32 %v343, 2147483648
    %v408 = vxor.u32 %v344, 2147483648
    %v409 = vxor.u32 %v345, 2147483648
    %v410 = vxor.u32 %v346, 2147483648
    %v411 = vxor.u32 %v347, 2147483648
    %v412 = vxor.u32 %v348, 2147483648
    %v413 = vxor.u32 %v349, 2147483648
    %v414 = vxor.u32 %v350, 2147483648
    %v415 = vxor.u32 %v351, 2147483648
    %v416 = vxor.u32 %v352, 2147483648
    %v417 = vxor.u32 %v353, 2147483648
    %v418 = vxor.u32 %v354, 2147483648
    %v419 = vxor.u32 %v355, 2147483648
    %v420 = vxor.u32 %v356, 2147483648
    %v421 = vxor.u32 %v357, 2147483648
    %v422 = vxor.u32 %v358, 2147483648
    %v423 = vxor.u32 %v359, 2147483648
    %v424 = vxor.u32 %v360, 2147483648
    %v425 = vxor.u32 %v361, 2147483648
    %v426 = vxor.u32 %v362, 2147483648
    %v427 = vxor.u32 %v363, 2147483648
    %v428 = vxor.u32 %v364, 2147483648
    %v429 = vxor.u32 %v365, 2147483648
    %v430 = vxor.u32 %v366, 2147483648
    %v431 = vxor.u32 %v367, 2147483648
    %v432 = vxor.u32 %v368, 2147483648
    %v433 = vxor.u32 %v369, 2147483648
    %v434 = vxor.u32 %v370, 2147483648
    %v435 = vxor.u32 %v371, 2147483648
    %v436 = vxor.u32 %v372, 2147483648
    %v437 = vxor.u32 %v373, 2147483648
    %v438 = vxor.u32 %v374, 2147483648
    %v439 = vxor.u32 %v375, 2147483648
    %v440 = vxor.u32 %v376, 2147483648
    %v441 = vxor.u32 %v377, 2147483648
    %v442 = vxor.u32 %v378, 2147483648
    %v443 = vxor.u32 %v379, 2147483648
    %v444 = vxor.u32 %v380, 2147483648
    %v445 = vxor.u32 %v381, 2147483648
    %v446 = vxor.u32 %v382, 2147483648
    %v447 = vxor.u32 %v383, 2147483648
    %v448 = vxor.u32 %v384, 2147483648
    %v449 = vxor.u32 %v385, 2147483648
    %v450 = vxor.u32 %v386, 2147483648
    %v451 = vxor.u32 %v387, 2147483648
    %v452 = vxor.u32 %v388, 2147483648
    %v453 = vxor.u32 %v389, 2147483648
    %v454 = vxor.u32 %v390, 2147483648
    %v455 = vxor.u32 %v391, 2147483648
    %v456 = vxor.u32 %v392, 2147483648
    %v457 = vxor.u32 %v393, 2147483648
    %v458 = vxor.u32 %v394, 2147483648
    %v459 = vxor.u32 %v395, 2147483648
    %v460 = vxor.u32 %v396, 2147483648
    %v461 = vxor.u32 %v397, 2147483648
    %v462 = vxor.u32 %v398, 2147483648
    %v463 = vxor.u32 %v399, 2147483648
    %v464 = vxor.u32 %v400, 2147483648
    %v465 = vxor.u32 %v401, 2147483648
    %v466 = vxor.u32 %v402, 2147483648
    %v467 = vxor.u32 %v403, 2147483648
    %v468 = vxor.u32 %v404, 2147483648
    %v469 = vxor.u32 %v405, 2147483648
    %v470 = vxor.u32 %v406, 2147483648
    %v471 = vmul.f32 %v407, 1.442695
    %v472 = vpow.pop %v471
    %v473 = vmul.f32 %v408, 1.442695
    %v474 = vpow.pop %v473
    %v475 = vmul.f32 %v409, 1.442695
    %v476 = vpow.pop %v475
    %v477 = vmul.f32 %v410, 1.442695
    %v478 = vpow.pop %v477
    %v479 = vmul.f32 %v411, 1.442695
    %v480 = vpow.pop %v479
    %v481 = vmul.f32 %v412, 1.442695
    %v482 = vpow.pop %v481
    %v483 = vmul.f32 %v413, 1.442695
    %v484 = vpow.pop %v483
    %v485 = vmul.f32 %v414, 1.442695
    %v486 = vpow.pop %v485
    %v487 = vmul.f32 %v415, 1.442695
    %v488 = vpow.pop %v487
    %v489 = vmul.f32 %v416, 1.442695
    %v490 = vpow.pop %v489
    %v491 = vmul.f32 %v417, 1.442695
    %v492 = vpow.pop %v491
    %v493 = vmul.f32 %v418, 1.442695
    %v494 = vpow.pop %v493
    %v495 = vmul.f32 %v419, 1.442695
    %v496 = vpow.pop %v495
    %v497 = vmul.f32 %v420, 1.442695
    %v498 = vpow.pop %v497
    %v499 = vmul.f32 %v421, 1.442695
    %v500 = vpow.pop %v499
    %v501 = vmul.f32 %v422, 1.442695
    %v502 = vpow.pop %v501
    %v503 = vmul.f32 %v423, 1.442695
    %v504 = vpow.pop %v503
    %v505 = vmul.f32 %v424, 1.442695
    %v506 = vpow.pop %v505
    %v507 = vmul.f32 %v425, 1.442695
    %v508 = vpow.pop %v507
    %v509 = vmul.f32 %v426, 1.442695
    %v510 = vpow.pop %v509
    %v511 = vmul.f32 %v427, 1.442695
    %v512 = vpow.pop %v511
    %v513 = vmul.f32 %v428, 1.442695
    %v514 = vpow.pop %v513
    %v515 = vmul.f32 %v429, 1.442695
    %v516 = vpow.pop %v515
    %v517 = vmul.f32 %v430, 1.442695
    %v518 = vpow.pop %v517
    %v519 = vmul.f32 %v431, 1.442695
    %v520 = vpow.pop %v519
    %v521 = vmul.f32 %v432, 1.442695
    %v522 = vpow.pop %v521
    %v523 = vmul.f32 %v433, 1.442695
    %v524 = vpow.pop %v523
    %v525 = vmul.f32 %v434, 1.442695
    %v526 = vpow.pop %v525
    %v527 = vmul.f32 %v435, 1.442695
    %v528 = vpow.pop %v527
    %v529 = vmul.f32 %v436, 1.442695
    %v530 = vpow.pop %v529
    %v531 = vmul.f32 %v437, 1.442695
    %v532 = vpow.pop %v531
    %v533 = vmul.f32 %v438, 1.442695
    %v534 = vpow.pop %v533
    %v535 = vmul.f32 %v439, 1.442695
    %v536 = vpow.pop %v535
    %v537 = vmul.f32 %v440, 1.442695
    %v538 = vpow.pop %v537
    %v539 = vmul.f32 %v441, 1.442695
    %v540 = vpow.pop %v539
    %v541 = vmul.f32 %v442, 1.442695
    %v542 = vpow.pop %v541
    %v543 = vmul.f32 %v443, 1.442695
    %v544 = vpow.pop %v543
    %v545 = vmul.f32 %v444, 1.442695
    %v546 = vpow.pop %v545
    %v547 = vmul.f32 %v445, 1.442695
    %v548 = vpow.pop %v547
    %v549 = vmul.f32 %v446, 1.442695
    %v550 = vpow.pop %v549
    %v551 = vmul.f32 %v447, 1.442695
    %v552 = vpow.pop %v551
    %v553 = vmul.f32 %v448, 1.442695
    %v554 = vpow.pop %v553
    %v555 = vmul.f32 %v449, 1.442695
    %v556 = vpow.pop %v555
    %v557 = vmul.f32 %v450, 1.442695
    %v558 = vpow.pop %v557
    %v559 = vmul.f32 %v451, 1.442695
    %v560 = vpow.pop %v559
    %v561 = vmul.f32 %v452, 1.442695
    %v562 = vpow.pop %v561
    %v563 = vmul.f32 %v453, 1.442695
    %v564 = vpow.pop %v563
    %v565 = vmul.f32 %v454, 1.442695
    %v566 = vpow.pop %v565
    %v567 = vmul.f32 %v455, 1.442695
    %v568 = vpow.pop %v567
    %v569 = vmul.f32 %v456, 1.442695
    %v570 = vpow.pop %v569
    %v571 = vmul.f32 %v457, 1.442695
    %v572 = vpow.pop %v571
    %v573 = vmul.f32 %v458, 1.442695
    %v574 = vpow.pop %v573
    %v575 = vmul.f32 %v459, 1.442695
    %v576 = vpow.pop %v575
    %v577 = vmul.f32 %v460, 1.442695
    %v578 = vpow.pop %v577
    %v579 = vmul.f32 %v461, 1.442695
    %v580 = vpow.pop %v579
    %v581 = vmul.f32 %v462, 1.442695
    %v582 = vpow.pop %v581
    %v583 = vmul.f32 %v463, 1.442695
    %v584 = vpow.pop %v583
    %v585 = vmul.f32 %v464, 1.442695
    %v586 = vpow.pop %v585
    %v587 = vmul.f32 %v465, 1.442695
    %v588 = vpow.pop %v587
    %v589 = vmul.f32 %v466, 1.442695
    %v590 = vpow.pop %v589
    %v591 = vmul.f32 %v467, 1.442695
    %v592 = vpow.pop %v591
    %v593 = vmul.f32 %v468, 1.442695
    %v594 = vpow.pop %v593
    %v595 = vmul.f32 %v469, 1.442695
    %v596 = vpow.pop %v595
    %v597 = vmul.f32 %v470, 1.442695
    %v598 = vpow.pop %v597
    %v599 = vadd.f32 %v472, 1.0
    %v600 = vadd.f32 %v474, 1.0
    %v601 = vadd.f32 %v476, 1.0
    %v602 = vadd.f32 %v478, 1.0
    %v603 = vadd.f32 %v480, 1.0
    %v604 = vadd.f32 %v482, 1.0
    %v605 = vadd.f32 %v484, 1.0
    %v606 = vadd.f32 %v486, 1.0
    %v607 = vadd.f32 %v488, 1.0
    %v608 = vadd.f32 %v490, 1.0
    %v609 = vadd.f32 %v492, 1.0
    %v610 = vadd.f32 %v494, 1.0
    %v611 = vadd.f32 %v496, 1.0
    %v612 = vadd.f32 %v498, 1.0
    %v613 = vadd.f32 %v500, 1.0
    %v614 = vadd.f32 %v502, 1.0
    %v615 = vadd.f32 %v504, 1.0
    %v616 = vadd.f32 %v506, 1.0
    %v617 = vadd.f32 %v508, 1.0
    %v618 = vadd.f32 %v510, 1.0
    %v619 = vadd.f32 %v512, 1.0
    %v620 = vadd.f32 %v514, 1.0
    %v621 = vadd.f32 %v516, 1.0
    %v622 = vadd.f32 %v518, 1.0
    %v623 = vadd.f32 %v520, 1.0
    %v624 = vadd.f32 %v522, 1.0
    %v625 = vadd.f32 %v524, 1.0
    %v626 = vadd.f32 %v526, 1.0
    %v627 = vadd.f32 %v528, 1.0
    %v628 = vadd.f32 %v530, 1.0
    %v629 = vadd.f32 %v532, 1.0
    %v630 = vadd.f32 %v534, 1.0
    %v631 = vadd.f32 %v536, 1.0
    %v632 = vadd.f32 %v538, 1.0
    %v633 = vadd.f32 %v540, 1.0
    %v634 = vadd.f32 %v542, 1.0
    %v635 = vadd.f32 %v544, 1.0
    %v636 = vadd.f32 %v546, 1.0
    %v637 = vadd.f32 %v548, 1.0
    %v638 = vadd.f32 %v550, 1.0
    %v639 = vadd.f32 %v552, 1.0
    %v640 = vadd.f32 %v554, 1.0
    %v641 = vadd.f32 %v556, 1.0
    %v642 = vadd.f32 %v558, 1.0
    %v643 = vadd.f32 %v560, 1.0
    %v644 = vadd.f32 %v562, 1.0
    %v645 = vadd.f32 %v564, 1.0
    %v646 = vadd.f32 %v566, 1.0
    %v647 = vadd.f32 %v568, 1.0
    %v648 = vadd.f32 %v570, 1.0
    %v649 = vadd.f32 %v572, 1.0
    %v650 = vadd.f32 %v574, 1.0
    %v651 = vadd.f32 %v576, 1.0
    %v652 = vadd.f32 %v578, 1.0
    %v653 = vadd.f32 %v580, 1.0
    %v654 = vadd.f32 %v582, 1.0
    %v655 = vadd.f32 %v584, 1.0
    %v656 = vadd.f32 %v586, 1.0
    %v657 = vadd.f32 %v588, 1.0
    %v658 = vadd.f32 %v590, 1.0
    %v659 = vadd.f32 %v592, 1.0
    %v660 = vadd.f32 %v594, 1.0
    %v661 = vadd.f32 %v596, 1.0
    %v662 = vadd.f32 %v598, 1.0
    %v663 = vrcp.pop %v599
    %v664 = vmul.f32 %v599, %v663
    %v665 = vsub.f32 1.0, %v664
    %v666 = vmul.f32 %v663, %v665
    %v667 = vadd.f32 %v663, %v666
    %vm668 = vweird.f32 %v599
    %vm669 = vweird.f32 %v663
    %vm670 = vmor %vm668, %vm669
    %v671 = vsel %vm670, %v663, %v667
    %v672 = vand.u32 2147483647, %v599
    %vm673 = vcmp.eq.f32.partialorder %v672, 8.507059e+37
    %v674 = vand.u32 %v599, 2147483648
    %v675 = vor.u32 1.1754944e-38, %v674
    %v676 = vsel %vm673, %v675, %v671
    %v677 = vmul.f32 1.0, %v676
    %v678 = vrcp.pop %v600
    %v679 = vmul.f32 %v600, %v678
    %v680 = vsub.f32 1.0, %v679
    %v681 = vmul.f32 %v678, %v680
    %v682 = vadd.f32 %v678, %v681
    %vm683 = vweird.f32 %v600
    %vm684 = vweird.f32 %v678
    %vm685 = vmor %vm683, %vm684
    %v686 = vsel %vm685, %v678, %v682
    %v687 = vand.u32 2147483647, %v600
    %vm688 = vcmp.eq.f32.partialorder %v687, 8.507059e+37
    %v689 = vand.u32 %v600, 2147483648
    %v690 = vor.u32 1.1754944e-38, %v689
    %v691 = vsel %vm688, %v690, %v686
    %v692 = vmul.f32 1.0, %v691
    %v693 = vrcp.pop %v601
    %v694 = vmul.f32 %v601, %v693
    %v695 = vsub.f32 1.0, %v694
    %v696 = vmul.f32 %v693, %v695
    %v697 = vadd.f32 %v693, %v696
    %vm698 = vweird.f32 %v601
    %vm699 = vweird.f32 %v693
    %vm700 = vmor %vm698, %vm699
    %v701 = vsel %vm700, %v693, %v697
    %v702 = vand.u32 2147483647, %v601
    %vm703 = vcmp.eq.f32.partialorder %v702, 8.507059e+37
    %v704 = vand.u32 %v601, 2147483648
    %v705 = vor.u32 1.1754944e-38, %v704
    %v706 = vsel %vm703, %v705, %v701
    %v707 = vmul.f32 1.0, %v706
    %v708 = vrcp.pop %v602
    %v709 = vmul.f32 %v602, %v708
    %v710 = vsub.f32 1.0, %v709
    %v711 = vmul.f32 %v708, %v710
    %v712 = vadd.f32 %v708, %v711
    %vm713 = vweird.f32 %v602
    %vm714 = vweird.f32 %v708
    %vm715 = vmor %vm713, %vm714
    %v716 = vsel %vm715, %v708, %v712
    %v717 = vand.u32 2147483647, %v602
    %vm718 = vcmp.eq.f32.partialorder %v717, 8.507059e+37
    %v719 = vand.u32 %v602, 2147483648
    %v720 = vor.u32 1.1754944e-38, %v719
    %v721 = vsel %vm718, %v720, %v716
    %v722 = vmul.f32 1.0, %v721
    %v723 = vrcp.pop %v603
    %v724 = vmul.f32 %v603, %v723
    %v725 = vsub.f32 1.0, %v724
    %v726 = vmul.f32 %v723, %v725
    %v727 = vadd.f32 %v723, %v726
    %vm728 = vweird.f32 %v603
    %vm729 = vweird.f32 %v723
    %vm730 = vmor %vm728, %vm729
    %v731 = vsel %vm730, %v723, %v727
    %v732 = vand.u32 2147483647, %v603
    %vm733 = vcmp.eq.f32.partialorder %v732, 8.507059e+37
    %v734 = vand.u32 %v603, 2147483648
    %v735 = vor.u32 1.1754944e-38, %v734
    %v736 = vsel %vm733, %v735, %v731
    %v737 = vmul.f32 1.0, %v736
    %v738 = vrcp.pop %v604
    %v739 = vmul.f32 %v604, %v738
    %v740 = vsub.f32 1.0, %v739
    %v741 = vmul.f32 %v738, %v740
    %v742 = vadd.f32 %v738, %v741
    %vm743 = vweird.f32 %v604
    %vm744 = vweird.f32 %v738
    %vm745 = vmor %vm743, %vm744
    %v746 = vsel %vm745, %v738, %v742
    %v747 = vand.u32 2147483647, %v604
    %vm748 = vcmp.eq.f32.partialorder %v747, 8.507059e+37
    %v749 = vand.u32 %v604, 2147483648
    %v750 = vor.u32 1.1754944e-38, %v749
    %v751 = vsel %vm748, %v750, %v746
    %v752 = vmul.f32 1.0, %v751
    %v753 = vrcp.pop %v605
    %v754 = vmul.f32 %v605, %v753
    %v755 = vsub.f32 1.0, %v754
    %v756 = vmul.f32 %v753, %v755
    %v757 = vadd.f32 %v753, %v756
    %vm758 = vweird.f32 %v605
    %vm759 = vweird.f32 %v753
    %vm760 = vmor %vm758, %vm759
    %v761 = vsel %vm760, %v753, %v757
    %v762 = vand.u32 2147483647, %v605
    %vm763 = vcmp.eq.f32.partialorder %v762, 8.507059e+37
    %v764 = vand.u32 %v605, 2147483648
    %v765 = vor.u32 1.1754944e-38, %v764
    %v766 = vsel %vm763, %v765, %v761
    %v767 = vmul.f32 1.0, %v766
    %v768 = vrcp.pop %v606
    %v769 = vmul.f32 %v606, %v768
    %v770 = vsub.f32 1.0, %v769
    %v771 = vmul.f32 %v768, %v770
    %v772 = vadd.f32 %v768, %v771
    %vm773 = vweird.f32 %v606
    %vm774 = vweird.f32 %v768
    %vm775 = vmor %vm773, %vm774
    %v776 = vsel %vm775, %v768, %v772
    %v777 = vand.u32 2147483647, %v606
    %vm778 = vcmp.eq.f32.partialorder %v777, 8.507059e+37
    %v779 = vand.u32 %v606, 2147483648
    %v780 = vor.u32 1.1754944e-38, %v779
    %v781 = vsel %vm778, %v780, %v776
    %v782 = vmul.f32 1.0, %v781
    %v783 = vrcp.pop %v607
    %v784 = vmul.f32 %v607, %v783
    %v785 = vsub.f32 1.0, %v784
    %v786 = vmul.f32 %v783, %v785
    %v787 = vadd.f32 %v783, %v786
    %vm788 = vweird.f32 %v607
    %vm789 = vweird.f32 %v783
    %vm790 = vmor %vm788, %vm789
    %v791 = vsel %vm790, %v783, %v787
    %v792 = vand.u32 2147483647, %v607
    %vm793 = vcmp.eq.f32.partialorder %v792, 8.507059e+37
    %v794 = vand.u32 %v607, 2147483648
    %v795 = vor.u32 1.1754944e-38, %v794
    %v796 = vsel %vm793, %v795, %v791
    %v797 = vmul.f32 1.0, %v796
    %v798 = vrcp.pop %v608
    %v799 = vmul.f32 %v608, %v798
    %v800 = vsub.f32 1.0, %v799
    %v801 = vmul.f32 %v798, %v800
    %v802 = vadd.f32 %v798, %v801
    %vm803 = vweird.f32 %v608
    %vm804 = vweird.f32 %v798
    %vm805 = vmor %vm803, %vm804
    %v806 = vsel %vm805, %v798, %v802
    %v807 = vand.u32 2147483647, %v608
    %vm808 = vcmp.eq.f32.partialorder %v807, 8.507059e+37
    %v809 = vand.u32 %v608, 2147483648
    %v810 = vor.u32 1.1754944e-38, %v809
    %v811 = vsel %vm808, %v810, %v806
    %v812 = vmul.f32 1.0, %v811
    %v813 = vrcp.pop %v609
    %v814 = vmul.f32 %v609, %v813
    %v815 = vsub.f32 1.0, %v814
    %v816 = vmul.f32 %v813, %v815
    %v817 = vadd.f32 %v813, %v816
    %vm818 = vweird.f32 %v609
    %vm819 = vweird.f32 %v813
    %vm820 = vmor %vm818, %vm819
    %v821 = vsel %vm820, %v813, %v817
    %v822 = vand.u32 2147483647, %v609
    %vm823 = vcmp.eq.f32.partialorder %v822, 8.507059e+37
    %v824 = vand.u32 %v609, 2147483648
    %v825 = vor.u32 1.1754944e-38, %v824
    %v826 = vsel %vm823, %v825, %v821
    %v827 = vmul.f32 1.0, %v826
    %v828 = vrcp.pop %v610
    %v829 = vmul.f32 %v610, %v828
    %v830 = vsub.f32 1.0, %v829
    %v831 = vmul.f32 %v828, %v830
    %v832 = vadd.f32 %v828, %v831
    %vm833 = vweird.f32 %v610
    %vm834 = vweird.f32 %v828
    %vm835 = vmor %vm833, %vm834
    %v836 = vsel %vm835, %v828, %v832
    %v837 = vand.u32 2147483647, %v610
    %vm838 = vcmp.eq.f32.partialorder %v837, 8.507059e+37
    %v839 = vand.u32 %v610, 2147483648
    %v840 = vor.u32 1.1754944e-38, %v839
    %v841 = vsel %vm838, %v840, %v836
    %v842 = vmul.f32 1.0, %v841
    %v843 = vrcp.pop %v611
    %v844 = vmul.f32 %v611, %v843
    %v845 = vsub.f32 1.0, %v844
    %v846 = vmul.f32 %v843, %v845
    %v847 = vadd.f32 %v843, %v846
    %vm848 = vweird.f32 %v611
    %vm849 = vweird.f32 %v843
    %vm850 = vmor %vm848, %vm849
    %v851 = vsel %vm850, %v843, %v847
    %v852 = vand.u32 2147483647, %v611
    %vm853 = vcmp.eq.f32.partialorder %v852, 8.507059e+37
    %v854 = vand.u32 %v611, 2147483648
    %v855 = vor.u32 1.1754944e-38, %v854
    %v856 = vsel %vm853, %v855, %v851
    %v857 = vmul.f32 1.0, %v856
    %v858 = vrcp.pop %v612
    %v859 = vmul.f32 %v612, %v858
    %v860 = vsub.f32 1.0, %v859
    %v861 = vmul.f32 %v858, %v860
    %v862 = vadd.f32 %v858, %v861
    %vm863 = vweird.f32 %v612
    %vm864 = vweird.f32 %v858
    %vm865 = vmor %vm863, %vm864
    %v866 = vsel %vm865, %v858, %v862
    %v867 = vand.u32 2147483647, %v612
    %vm868 = vcmp.eq.f32.partialorder %v867, 8.507059e+37
    %v869 = vand.u32 %v612, 2147483648
    %v870 = vor.u32 1.1754944e-38, %v869
    %v871 = vsel %vm868, %v870, %v866
    %v872 = vmul.f32 1.0, %v871
    %v873 = vrcp.pop %v613
    %v874 = vmul.f32 %v613, %v873
    %v875 = vsub.f32 1.0, %v874
    %v876 = vmul.f32 %v873, %v875
    %v877 = vadd.f32 %v873, %v876
    %vm878 = vweird.f32 %v613
    %vm879 = vweird.f32 %v873
    %vm880 = vmor %vm878, %vm879
    %v881 = vsel %vm880, %v873, %v877
    %v882 = vand.u32 2147483647, %v613
    %vm883 = vcmp.eq.f32.partialorder %v882, 8.507059e+37
    %v884 = vand.u32 %v613, 2147483648
    %v885 = vor.u32 1.1754944e-38, %v884
    %v886 = vsel %vm883, %v885, %v881
    %v887 = vmul.f32 1.0, %v886
    %v888 = vrcp.pop %v614
    %v889 = vmul.f32 %v614, %v888
    %v890 = vsub.f32 1.0, %v889
    %v891 = vmul.f32 %v888, %v890
    %v892 = vadd.f32 %v888, %v891
    %vm893 = vweird.f32 %v614
    %vm894 = vweird.f32 %v888
    %vm895 = vmor %vm893, %vm894
    %v896 = vsel %vm895, %v888, %v892
    %v897 = vand.u32 2147483647, %v614
    %vm898 = vcmp.eq.f32.partialorder %v897, 8.507059e+37
    %v899 = vand.u32 %v614, 2147483648
    %v900 = vor.u32 1.1754944e-38, %v899
    %v901 = vsel %vm898, %v900, %v896
    %v902 = vmul.f32 1.0, %v901
    %v903 = vrcp.pop %v615
    %v904 = vmul.f32 %v615, %v903
    %v905 = vsub.f32 1.0, %v904
    %v906 = vmul.f32 %v903, %v905
    %v907 = vadd.f32 %v903, %v906
    %vm908 = vweird.f32 %v615
    %vm909 = vweird.f32 %v903
    %vm910 = vmor %vm908, %vm909
    %v911 = vsel %vm910, %v903, %v907
    %v912 = vand.u32 2147483647, %v615
    %vm913 = vcmp.eq.f32.partialorder %v912, 8.507059e+37
    %v914 = vand.u32 %v615, 2147483648
    %v915 = vor.u32 1.1754944e-38, %v914
    %v916 = vsel %vm913, %v915, %v911
    %v917 = vmul.f32 1.0, %v916
    %v918 = vrcp.pop %v616
    %v919 = vmul.f32 %v616, %v918
    %v920 = vsub.f32 1.0, %v919
    %v921 = vmul.f32 %v918, %v920
    %v922 = vadd.f32 %v918, %v921
    %vm923 = vweird.f32 %v616
    %vm924 = vweird.f32 %v918
    %vm925 = vmor %vm923, %vm924
    %v926 = vsel %vm925, %v918, %v922
    %v927 = vand.u32 2147483647, %v616
    %vm928 = vcmp.eq.f32.partialorder %v927, 8.507059e+37
    %v929 = vand.u32 %v616, 2147483648
    %v930 = vor.u32 1.1754944e-38, %v929
    %v931 = vsel %vm928, %v930, %v926
    %v932 = vmul.f32 1.0, %v931
    %v933 = vrcp.pop %v617
    %v934 = vmul.f32 %v617, %v933
    %v935 = vsub.f32 1.0, %v934
    %v936 = vmul.f32 %v933, %v935
    %v937 = vadd.f32 %v933, %v936
    %vm938 = vweird.f32 %v617
    %vm939 = vweird.f32 %v933
    %vm940 = vmor %vm938, %vm939
    %v941 = vsel %vm940, %v933, %v937
    %v942 = vand.u32 2147483647, %v617
    %vm943 = vcmp.eq.f32.partialorder %v942, 8.507059e+37
    %v944 = vand.u32 %v617, 2147483648
    %v945 = vor.u32 1.1754944e-38, %v944
    %v946 = vsel %vm943, %v945, %v941
    %v947 = vmul.f32 1.0, %v946
    %v948 = vrcp.pop %v618
    %v949 = vmul.f32 %v618, %v948
    %v950 = vsub.f32 1.0, %v949
    %v951 = vmul.f32 %v948, %v950
    %v952 = vadd.f32 %v948, %v951
    %vm953 = vweird.f32 %v618
    %vm954 = vweird.f32 %v948
    %vm955 = vmor %vm953, %vm954
    %v956 = vsel %vm955, %v948, %v952
    %v957 = vand.u32 2147483647, %v618
    %vm958 = vcmp.eq.f32.partialorder %v957, 8.507059e+37
    %v959 = vand.u32 %v618, 2147483648
    %v960 = vor.u32 1.1754944e-38, %v959
    %v961 = vsel %vm958, %v960, %v956
    %v962 = vmul.f32 1.0, %v961
    %v963 = vrcp.pop %v619
    %v964 = vmul.f32 %v619, %v963
    %v965 = vsub.f32 1.0, %v964
    %v966 = vmul.f32 %v963, %v965
    %v967 = vadd.f32 %v963, %v966
    %vm968 = vweird.f32 %v619
    %vm969 = vweird.f32 %v963
    %vm970 = vmor %vm968, %vm969
    %v971 = vsel %vm970, %v963, %v967
    %v972 = vand.u32 2147483647, %v619
    %vm973 = vcmp.eq.f32.partialorder %v972, 8.507059e+37
    %v974 = vand.u32 %v619, 2147483648
    %v975 = vor.u32 1.1754944e-38, %v974
    %v976 = vsel %vm973, %v975, %v971
    %v977 = vmul.f32 1.0, %v976
    %v978 = vrcp.pop %v620
    %v979 = vmul.f32 %v620, %v978
    %v980 = vsub.f32 1.0, %v979
    %v981 = vmul.f32 %v978, %v980
    %v982 = vadd.f32 %v978, %v981
    %vm983 = vweird.f32 %v620
    %vm984 = vweird.f32 %v978
    %vm985 = vmor %vm983, %vm984
    %v986 = vsel %vm985, %v978, %v982
    %v987 = vand.u32 2147483647, %v620
    %vm988 = vcmp.eq.f32.partialorder %v987, 8.507059e+37
    %v989 = vand.u32 %v620, 2147483648
    %v990 = vor.u32 1.1754944e-38, %v989
    %v991 = vsel %vm988, %v990, %v986
    %v992 = vmul.f32 1.0, %v991
    %v993 = vrcp.pop %v621
    %v994 = vmul.f32 %v621, %v993
    %v995 = vsub.f32 1.0, %v994
    %v996 = vmul.f32 %v993, %v995
    %v997 = vadd.f32 %v993, %v996
    %vm998 = vweird.f32 %v621
    %vm999 = vweird.f32 %v993
    %vm1000 = vmor %vm998, %vm999
    %v1001 = vsel %vm1000, %v993, %v997
    %v1002 = vand.u32 2147483647, %v621
    %vm1003 = vcmp.eq.f32.partialorder %v1002, 8.507059e+37
    %v1004 = vand.u32 %v621, 2147483648
    %v1005 = vor.u32 1.1754944e-38, %v1004
    %v1006 = vsel %vm1003, %v1005, %v1001
    %v1007 = vmul.f32 1.0, %v1006
    %v1008 = vrcp.pop %v622
    %v1009 = vmul.f32 %v622, %v1008
    %v1010 = vsub.f32 1.0, %v1009
    %v1011 = vmul.f32 %v1008, %v1010
    %v1012 = vadd.f32 %v1008, %v1011
    %vm1013 = vweird.f32 %v622
    %vm1014 = vweird.f32 %v1008
    %vm1015 = vmor %vm1013, %vm1014
    %v1016 = vsel %vm1015, %v1008, %v1012
    %v1017 = vand.u32 2147483647, %v622
    %vm1018 = vcmp.eq.f32.partialorder %v1017, 8.507059e+37
    %v1019 = vand.u32 %v622, 2147483648
    %v1020 = vor.u32 1.1754944e-38, %v1019
    %v1021 = vsel %vm1018, %v1020, %v1016
    %v1022 = vmul.f32 1.0, %v1021
    %v1023 = vrcp.pop %v623
    %v1024 = vmul.f32 %v623, %v1023
    %v1025 = vsub.f32 1.0, %v1024
    %v1026 = vmul.f32 %v1023, %v1025
    %v1027 = vadd.f32 %v1023, %v1026
    %vm1028 = vweird.f32 %v623
    %vm1029 = vweird.f32 %v1023
    %vm1030 = vmor %vm1028, %vm1029
    %v1031 = vsel %vm1030, %v1023, %v1027
    %v1032 = vand.u32 2147483647, %v623
    %vm1033 = vcmp.eq.f32.partialorder %v1032, 8.507059e+37
    %v1034 = vand.u32 %v623, 2147483648
    %v1035 = vor.u32 1.1754944e-38, %v1034
    %v1036 = vsel %vm1033, %v1035, %v1031
    %v1037 = vmul.f32 1.0, %v1036
    %v1038 = vrcp.pop %v624
    %v1039 = vmul.f32 %v624, %v1038
    %v1040 = vsub.f32 1.0, %v1039
    %v1041 = vmul.f32 %v1038, %v1040
    %v1042 = vadd.f32 %v1038, %v1041
    %vm1043 = vweird.f32 %v624
    %vm1044 = vweird.f32 %v1038
    %vm1045 = vmor %vm1043, %vm1044
    %v1046 = vsel %vm1045, %v1038, %v1042
    %v1047 = vand.u32 2147483647, %v624
    %vm1048 = vcmp.eq.f32.partialorder %v1047, 8.507059e+37
    %v1049 = vand.u32 %v624, 2147483648
    %v1050 = vor.u32 1.1754944e-38, %v1049
    %v1051 = vsel %vm1048, %v1050, %v1046
    %v1052 = vmul.f32 1.0, %v1051
    %v1053 = vrcp.pop %v625
    %v1054 = vmul.f32 %v625, %v1053
    %v1055 = vsub.f32 1.0, %v1054
    %v1056 = vmul.f32 %v1053, %v1055
    %v1057 = vadd.f32 %v1053, %v1056
    %vm1058 = vweird.f32 %v625
    %vm1059 = vweird.f32 %v1053
    %vm1060 = vmor %vm1058, %vm1059
    %v1061 = vsel %vm1060, %v1053, %v1057
    %v1062 = vand.u32 2147483647, %v625
    %vm1063 = vcmp.eq.f32.partialorder %v1062, 8.507059e+37
    %v1064 = vand.u32 %v625, 2147483648
    %v1065 = vor.u32 1.1754944e-38, %v1064
    %v1066 = vsel %vm1063, %v1065, %v1061
    %v1067 = vmul.f32 1.0, %v1066
    %v1068 = vrcp.pop %v626
    %v1069 = vmul.f32 %v626, %v1068
    %v1070 = vsub.f32 1.0, %v1069
    %v1071 = vmul.f32 %v1068, %v1070
    %v1072 = vadd.f32 %v1068, %v1071
    %vm1073 = vweird.f32 %v626
    %vm1074 = vweird.f32 %v1068
    %vm1075 = vmor %vm1073, %vm1074
    %v1076 = vsel %vm1075, %v1068, %v1072
    %v1077 = vand.u32 2147483647, %v626
    %vm1078 = vcmp.eq.f32.partialorder %v1077, 8.507059e+37
    %v1079 = vand.u32 %v626, 2147483648
    %v1080 = vor.u32 1.1754944e-38, %v1079
    %v1081 = vsel %vm1078, %v1080, %v1076
    %v1082 = vmul.f32 1.0, %v1081
    %v1083 = vrcp.pop %v627
    %v1084 = vmul.f32 %v627, %v1083
    %v1085 = vsub.f32 1.0, %v1084
    %v1086 = vmul.f32 %v1083, %v1085
    %v1087 = vadd.f32 %v1083, %v1086
    %vm1088 = vweird.f32 %v627
    %vm1089 = vweird.f32 %v1083
    %vm1090 = vmor %vm1088, %vm1089
    %v1091 = vsel %vm1090, %v1083, %v1087
    %v1092 = vand.u32 2147483647, %v627
    %vm1093 = vcmp.eq.f32.partialorder %v1092, 8.507059e+37
    %v1094 = vand.u32 %v627, 2147483648
    %v1095 = vor.u32 1.1754944e-38, %v1094
    %v1096 = vsel %vm1093, %v1095, %v1091
    %v1097 = vmul.f32 1.0, %v1096
    %v1098 = vrcp.pop %v628
    %v1099 = vmul.f32 %v628, %v1098
    %v1100 = vsub.f32 1.0, %v1099
    %v1101 = vmul.f32 %v1098, %v1100
    %v1102 = vadd.f32 %v1098, %v1101
    %vm1103 = vweird.f32 %v628
    %vm1104 = vweird.f32 %v1098
    %vm1105 = vmor %vm1103, %vm1104
    %v1106 = vsel %vm1105, %v1098, %v1102
    %v1107 = vand.u32 2147483647, %v628
    %vm1108 = vcmp.eq.f32.partialorder %v1107, 8.507059e+37
    %v1109 = vand.u32 %v628, 2147483648
    %v1110 = vor.u32 1.1754944e-38, %v1109
    %v1111 = vsel %vm1108, %v1110, %v1106
    %v1112 = vmul.f32 1.0, %v1111
    %v1113 = vrcp.pop %v629
    %v1114 = vmul.f32 %v629, %v1113
    %v1115 = vsub.f32 1.0, %v1114
    %v1116 = vmul.f32 %v1113, %v1115
    %v1117 = vadd.f32 %v1113, %v1116
    %vm1118 = vweird.f32 %v629
    %vm1119 = vweird.f32 %v1113
    %vm1120 = vmor %vm1118, %vm1119
    %v1121 = vsel %vm1120, %v1113, %v1117
    %v1122 = vand.u32 2147483647, %v629
    %vm1123 = vcmp.eq.f32.partialorder %v1122, 8.507059e+37
    %v1124 = vand.u32 %v629, 2147483648
    %v1125 = vor.u32 1.1754944e-38, %v1124
    %v1126 = vsel %vm1123, %v1125, %v1121
    %v1127 = vmul.f32 1.0, %v1126
    %v1128 = vrcp.pop %v630
    %v1129 = vmul.f32 %v630, %v1128
    %v1130 = vsub.f32 1.0, %v1129
    %v1131 = vmul.f32 %v1128, %v1130
    %v1132 = vadd.f32 %v1128, %v1131
    %vm1133 = vweird.f32 %v630
    %vm1134 = vweird.f32 %v1128
    %vm1135 = vmor %vm1133, %vm1134
    %v1136 = vsel %vm1135, %v1128, %v1132
    %v1137 = vand.u32 2147483647, %v630
    %vm1138 = vcmp.eq.f32.partialorder %v1137, 8.507059e+37
    %v1139 = vand.u32 %v630, 2147483648
    %v1140 = vor.u32 1.1754944e-38, %v1139
    %v1141 = vsel %vm1138, %v1140, %v1136
    %v1142 = vmul.f32 1.0, %v1141
    %v1143 = vrcp.pop %v631
    %v1144 = vmul.f32 %v631, %v1143
    %v1145 = vsub.f32 1.0, %v1144
    %v1146 = vmul.f32 %v1143, %v1145
    %v1147 = vadd.f32 %v1143, %v1146
    %vm1148 = vweird.f32 %v631
    %vm1149 = vweird.f32 %v1143
    %vm1150 = vmor %vm1148, %vm1149
    %v1151 = vsel %vm1150, %v1143, %v1147
    %v1152 = vand.u32 2147483647, %v631
    %vm1153 = vcmp.eq.f32.partialorder %v1152, 8.507059e+37
    %v1154 = vand.u32 %v631, 2147483648
    %v1155 = vor.u32 1.1754944e-38, %v1154
    %v1156 = vsel %vm1153, %v1155, %v1151
    %v1157 = vmul.f32 1.0, %v1156
    %v1158 = vrcp.pop %v632
    %v1159 = vmul.f32 %v632, %v1158
    %v1160 = vsub.f32 1.0, %v1159
    %v1161 = vmul.f32 %v1158, %v1160
    %v1162 = vadd.f32 %v1158, %v1161
    %vm1163 = vweird.f32 %v632
    %vm1164 = vweird.f32 %v1158
    %vm1165 = vmor %vm1163, %vm1164
    %v1166 = vsel %vm1165, %v1158, %v1162
    %v1167 = vand.u32 2147483647, %v632
    %vm1168 = vcmp.eq.f32.partialorder %v1167, 8.507059e+37
    %v1169 = vand.u32 %v632, 2147483648
    %v1170 = vor.u32 1.1754944e-38, %v1169
    %v1171 = vsel %vm1168, %v1170, %v1166
    %v1172 = vmul.f32 1.0, %v1171
    %v1173 = vrcp.pop %v633
    %v1174 = vmul.f32 %v633, %v1173
    %v1175 = vsub.f32 1.0, %v1174
    %v1176 = vmul.f32 %v1173, %v1175
    %v1177 = vadd.f32 %v1173, %v1176
    %vm1178 = vweird.f32 %v633
    %vm1179 = vweird.f32 %v1173
    %vm1180 = vmor %vm1178, %vm1179
    %v1181 = vsel %vm1180, %v1173, %v1177
    %v1182 = vand.u32 2147483647, %v633
    %vm1183 = vcmp.eq.f32.partialorder %v1182, 8.507059e+37
    %v1184 = vand.u32 %v633, 2147483648
    %v1185 = vor.u32 1.1754944e-38, %v1184
    %v1186 = vsel %vm1183, %v1185, %v1181
    %v1187 = vmul.f32 1.0, %v1186
    %v1188 = vrcp.pop %v634
    %v1189 = vmul.f32 %v634, %v1188
    %v1190 = vsub.f32 1.0, %v1189
    %v1191 = vmul.f32 %v1188, %v1190
    %v1192 = vadd.f32 %v1188, %v1191
    %vm1193 = vweird.f32 %v634
    %vm1194 = vweird.f32 %v1188
    %vm1195 = vmor %vm1193, %vm1194
    %v1196 = vsel %vm1195, %v1188, %v1192
    %v1197 = vand.u32 2147483647, %v634
    %vm1198 = vcmp.eq.f32.partialorder %v1197, 8.507059e+37
    %v1199 = vand.u32 %v634, 2147483648
    %v1200 = vor.u32 1.1754944e-38, %v1199
    %v1201 = vsel %vm1198, %v1200, %v1196
    %v1202 = vmul.f32 1.0, %v1201
    %v1203 = vrcp.pop %v635
    %v1204 = vmul.f32 %v635, %v1203
    %v1205 = vsub.f32 1.0, %v1204
    %v1206 = vmul.f32 %v1203, %v1205
    %v1207 = vadd.f32 %v1203, %v1206
    %vm1208 = vweird.f32 %v635
    %vm1209 = vweird.f32 %v1203
    %vm1210 = vmor %vm1208, %vm1209
    %v1211 = vsel %vm1210, %v1203, %v1207
    %v1212 = vand.u32 2147483647, %v635
    %vm1213 = vcmp.eq.f32.partialorder %v1212, 8.507059e+37
    %v1214 = vand.u32 %v635, 2147483648
    %v1215 = vor.u32 1.1754944e-38, %v1214
    %v1216 = vsel %vm1213, %v1215, %v1211
    %v1217 = vmul.f32 1.0, %v1216
    %v1218 = vrcp.pop %v636
    %v1219 = vmul.f32 %v636, %v1218
    %v1220 = vsub.f32 1.0, %v1219
    %v1221 = vmul.f32 %v1218, %v1220
    %v1222 = vadd.f32 %v1218, %v1221
    %vm1223 = vweird.f32 %v636
    %vm1224 = vweird.f32 %v1218
    %vm1225 = vmor %vm1223, %vm1224
    %v1226 = vsel %vm1225, %v1218, %v1222
    %v1227 = vand.u32 2147483647, %v636
    %vm1228 = vcmp.eq.f32.partialorder %v1227, 8.507059e+37
    %v1229 = vand.u32 %v636, 2147483648
    %v1230 = vor.u32 1.1754944e-38, %v1229
    %v1231 = vsel %vm1228, %v1230, %v1226
    %v1232 = vmul.f32 1.0, %v1231
    %v1233 = vrcp.pop %v637
    %v1234 = vmul.f32 %v637, %v1233
    %v1235 = vsub.f32 1.0, %v1234
    %v1236 = vmul.f32 %v1233, %v1235
    %v1237 = vadd.f32 %v1233, %v1236
    %vm1238 = vweird.f32 %v637
    %vm1239 = vweird.f32 %v1233
    %vm1240 = vmor %vm1238, %vm1239
    %v1241 = vsel %vm1240, %v1233, %v1237
    %v1242 = vand.u32 2147483647, %v637
    %vm1243 = vcmp.eq.f32.partialorder %v1242, 8.507059e+37
    %v1244 = vand.u32 %v637, 2147483648
    %v1245 = vor.u32 1.1754944e-38, %v1244
    %v1246 = vsel %vm1243, %v1245, %v1241
    %v1247 = vmul.f32 1.0, %v1246
    %v1248 = vrcp.pop %v638
    %v1249 = vmul.f32 %v638, %v1248
    %v1250 = vsub.f32 1.0, %v1249
    %v1251 = vmul.f32 %v1248, %v1250
    %v1252 = vadd.f32 %v1248, %v1251
    %vm1253 = vweird.f32 %v638
    %vm1254 = vweird.f32 %v1248
    %vm1255 = vmor %vm1253, %vm1254
    %v1256 = vsel %vm1255, %v1248, %v1252
    %v1257 = vand.u32 2147483647, %v638
    %vm1258 = vcmp.eq.f32.partialorder %v1257, 8.507059e+37
    %v1259 = vand.u32 %v638, 2147483648
    %v1260 = vor.u32 1.1754944e-38, %v1259
    %v1261 = vsel %vm1258, %v1260, %v1256
    %v1262 = vmul.f32 1.0, %v1261
    %v1263 = vrcp.pop %v639
    %v1264 = vmul.f32 %v639, %v1263
    %v1265 = vsub.f32 1.0, %v1264
    %v1266 = vmul.f32 %v1263, %v1265
    %v1267 = vadd.f32 %v1263, %v1266
    %vm1268 = vweird.f32 %v639
    %vm1269 = vweird.f32 %v1263
    %vm1270 = vmor %vm1268, %vm1269
    %v1271 = vsel %vm1270, %v1263, %v1267
    %v1272 = vand.u32 2147483647, %v639
    %vm1273 = vcmp.eq.f32.partialorder %v1272, 8.507059e+37
    %v1274 = vand.u32 %v639, 2147483648
    %v1275 = vor.u32 1.1754944e-38, %v1274
    %v1276 = vsel %vm1273, %v1275, %v1271
    %v1277 = vmul.f32 1.0, %v1276
    %v1278 = vrcp.pop %v640
    %v1279 = vmul.f32 %v640, %v1278
    %v1280 = vsub.f32 1.0, %v1279
    %v1281 = vmul.f32 %v1278, %v1280
    %v1282 = vadd.f32 %v1278, %v1281
    %vm1283 = vweird.f32 %v640
    %vm1284 = vweird.f32 %v1278
    %vm1285 = vmor %vm1283, %vm1284
    %v1286 = vsel %vm1285, %v1278, %v1282
    %v1287 = vand.u32 2147483647, %v640
    %vm1288 = vcmp.eq.f32.partialorder %v1287, 8.507059e+37
    %v1289 = vand.u32 %v640, 2147483648
    %v1290 = vor.u32 1.1754944e-38, %v1289
    %v1291 = vsel %vm1288, %v1290, %v1286
    %v1292 = vmul.f32 1.0, %v1291
    %v1293 = vrcp.pop %v641
    %v1294 = vmul.f32 %v641, %v1293
    %v1295 = vsub.f32 1.0, %v1294
    %v1296 = vmul.f32 %v1293, %v1295
    %v1297 = vadd.f32 %v1293, %v1296
    %vm1298 = vweird.f32 %v641
    %vm1299 = vweird.f32 %v1293
    %vm1300 = vmor %vm1298, %vm1299
    %v1301 = vsel %vm1300, %v1293, %v1297
    %v1302 = vand.u32 2147483647, %v641
    %vm1303 = vcmp.eq.f32.partialorder %v1302, 8.507059e+37
    %v1304 = vand.u32 %v641, 2147483648
    %v1305 = vor.u32 1.1754944e-38, %v1304
    %v1306 = vsel %vm1303, %v1305, %v1301
    %v1307 = vmul.f32 1.0, %v1306
    %v1308 = vrcp.pop %v642
    %v1309 = vmul.f32 %v642, %v1308
    %v1310 = vsub.f32 1.0, %v1309
    %v1311 = vmul.f32 %v1308, %v1310
    %v1312 = vadd.f32 %v1308, %v1311
    %vm1313 = vweird.f32 %v642
    %vm1314 = vweird.f32 %v1308
    %vm1315 = vmor %vm1313, %vm1314
    %v1316 = vsel %vm1315, %v1308, %v1312
    %v1317 = vand.u32 2147483647, %v642
    %vm1318 = vcmp.eq.f32.partialorder %v1317, 8.507059e+37
    %v1319 = vand.u32 %v642, 2147483648
    %v1320 = vor.u32 1.1754944e-38, %v1319
    %v1321 = vsel %vm1318, %v1320, %v1316
    %v1322 = vmul.f32 1.0, %v1321
    %v1323 = vrcp.pop %v643
    %v1324 = vmul.f32 %v643, %v1323
    %v1325 = vsub.f32 1.0, %v1324
    %v1326 = vmul.f32 %v1323, %v1325
    %v1327 = vadd.f32 %v1323, %v1326
    %vm1328 = vweird.f32 %v643
    %vm1329 = vweird.f32 %v1323
    %vm1330 = vmor %vm1328, %vm1329
    %v1331 = vsel %vm1330, %v1323, %v1327
    %v1332 = vand.u32 2147483647, %v643
    %vm1333 = vcmp.eq.f32.partialorder %v1332, 8.507059e+37
    %v1334 = vand.u32 %v643, 2147483648
    %v1335 = vor.u32 1.1754944e-38, %v1334
    %v1336 = vsel %vm1333, %v1335, %v1331
    %v1337 = vmul.f32 1.0, %v1336
    %v1338 = vrcp.pop %v644
    %v1339 = vmul.f32 %v644, %v1338
    %v1340 = vsub.f32 1.0, %v1339
    %v1341 = vmul.f32 %v1338, %v1340
    %v1342 = vadd.f32 %v1338, %v1341
    %vm1343 = vweird.f32 %v644
    %vm1344 = vweird.f32 %v1338
    %vm1345 = vmor %vm1343, %vm1344
    %v1346 = vsel %vm1345, %v1338, %v1342
    %v1347 = vand.u32 2147483647, %v644
    %vm1348 = vcmp.eq.f32.partialorder %v1347, 8.507059e+37
    %v1349 = vand.u32 %v644, 2147483648
    %v1350 = vor.u32 1.1754944e-38, %v1349
    %v1351 = vsel %vm1348, %v1350, %v1346
    %v1352 = vmul.f32 1.0, %v1351
    %v1353 = vrcp.pop %v645
    %v1354 = vmul.f32 %v645, %v1353
    %v1355 = vsub.f32 1.0, %v1354
    %v1356 = vmul.f32 %v1353, %v1355
    %v1357 = vadd.f32 %v1353, %v1356
    %vm1358 = vweird.f32 %v645
    %vm1359 = vweird.f32 %v1353
    %vm1360 = vmor %vm1358, %vm1359
    %v1361 = vsel %vm1360, %v1353, %v1357
    %v1362 = vand.u32 2147483647, %v645
    %vm1363 = vcmp.eq.f32.partialorder %v1362, 8.507059e+37
    %v1364 = vand.u32 %v645, 2147483648
    %v1365 = vor.u32 1.1754944e-38, %v1364
    %v1366 = vsel %vm1363, %v1365, %v1361
    %v1367 = vmul.f32 1.0, %v1366
    %v1368 = vrcp.pop %v646
    %v1369 = vmul.f32 %v646, %v1368
    %v1370 = vsub.f32 1.0, %v1369
    %v1371 = vmul.f32 %v1368, %v1370
    %v1372 = vadd.f32 %v1368, %v1371
    %vm1373 = vweird.f32 %v646
    %vm1374 = vweird.f32 %v1368
    %vm1375 = vmor %vm1373, %vm1374
    %v1376 = vsel %vm1375, %v1368, %v1372
    %v1377 = vand.u32 2147483647, %v646
    %vm1378 = vcmp.eq.f32.partialorder %v1377, 8.507059e+37
    %v1379 = vand.u32 %v646, 2147483648
    %v1380 = vor.u32 1.1754944e-38, %v1379
    %v1381 = vsel %vm1378, %v1380, %v1376
    %v1382 = vmul.f32 1.0, %v1381
    %v1383 = vrcp.pop %v647
    %v1384 = vmul.f32 %v647, %v1383
    %v1385 = vsub.f32 1.0, %v1384
    %v1386 = vmul.f32 %v1383, %v1385
    %v1387 = vadd.f32 %v1383, %v1386
    %vm1388 = vweird.f32 %v647
    %vm1389 = vweird.f32 %v1383
    %vm1390 = vmor %vm1388, %vm1389
    %v1391 = vsel %vm1390, %v1383, %v1387
    %v1392 = vand.u32 2147483647, %v647
    %vm1393 = vcmp.eq.f32.partialorder %v1392, 8.507059e+37
    %v1394 = vand.u32 %v647, 2147483648
    %v1395 = vor.u32 1.1754944e-38, %v1394
    %v1396 = vsel %vm1393, %v1395, %v1391
    %v1397 = vmul.f32 1.0, %v1396
    %v1398 = vrcp.pop %v648
    %v1399 = vmul.f32 %v648, %v1398
    %v1400 = vsub.f32 1.0, %v1399
    %v1401 = vmul.f32 %v1398, %v1400
    %v1402 = vadd.f32 %v1398, %v1401
    %vm1403 = vweird.f32 %v648
    %vm1404 = vweird.f32 %v1398
    %vm1405 = vmor %vm1403, %vm1404
    %v1406 = vsel %vm1405, %v1398, %v1402
    %v1407 = vand.u32 2147483647, %v648
    %vm1408 = vcmp.eq.f32.partialorder %v1407, 8.507059e+37
    %v1409 = vand.u32 %v648, 2147483648
    %v1410 = vor.u32 1.1754944e-38, %v1409
    %v1411 = vsel %vm1408, %v1410, %v1406
    %v1412 = vmul.f32 1.0, %v1411
    %v1413 = vrcp.pop %v649
    %v1414 = vmul.f32 %v649, %v1413
    %v1415 = vsub.f32 1.0, %v1414
    %v1416 = vmul.f32 %v1413, %v1415
    %v1417 = vadd.f32 %v1413, %v1416
    %vm1418 = vweird.f32 %v649
    %vm1419 = vweird.f32 %v1413
    %vm1420 = vmor %vm1418, %vm1419
    %v1421 = vsel %vm1420, %v1413, %v1417
    %v1422 = vand.u32 2147483647, %v649
    %vm1423 = vcmp.eq.f32.partialorder %v1422, 8.507059e+37
    %v1424 = vand.u32 %v649, 2147483648
    %v1425 = vor.u32 1.1754944e-38, %v1424
    %v1426 = vsel %vm1423, %v1425, %v1421
    %v1427 = vmul.f32 1.0, %v1426
    %v1428 = vrcp.pop %v650
    %v1429 = vmul.f32 %v650, %v1428
    %v1430 = vsub.f32 1.0, %v1429
    %v1431 = vmul.f32 %v1428, %v1430
    %v1432 = vadd.f32 %v1428, %v1431
    %vm1433 = vweird.f32 %v650
    %vm1434 = vweird.f32 %v1428
    %vm1435 = vmor %vm1433, %vm1434
    %v1436 = vsel %vm1435, %v1428, %v1432
    %v1437 = vand.u32 2147483647, %v650
    %vm1438 = vcmp.eq.f32.partialorder %v1437, 8.507059e+37
    %v1439 = vand.u32 %v650, 2147483648
    %v1440 = vor.u32 1.1754944e-38, %v1439
    %v1441 = vsel %vm1438, %v1440, %v1436
    %v1442 = vmul.f32 1.0, %v1441
    %v1443 = vrcp.pop %v651
    %v1444 = vmul.f32 %v651, %v1443
    %v1445 = vsub.f32 1.0, %v1444
    %v1446 = vmul.f32 %v1443, %v1445
    %v1447 = vadd.f32 %v1443, %v1446
    %vm1448 = vweird.f32 %v651
    %vm1449 = vweird.f32 %v1443
    %vm1450 = vmor %vm1448, %vm1449
    %v1451 = vsel %vm1450, %v1443, %v1447
    %v1452 = vand.u32 2147483647, %v651
    %vm1453 = vcmp.eq.f32.partialorder %v1452, 8.507059e+37
    %v1454 = vand.u32 %v651, 2147483648
    %v1455 = vor.u32 1.1754944e-38, %v1454
    %v1456 = vsel %vm1453, %v1455, %v1451
    %v1457 = vmul.f32 1.0, %v1456
    %v1458 = vrcp.pop %v652
    %v1459 = vmul.f32 %v652, %v1458
    %v1460 = vsub.f32 1.0, %v1459
    %v1461 = vmul.f32 %v1458, %v1460
    %v1462 = vadd.f32 %v1458, %v1461
    %vm1463 = vweird.f32 %v652
    %vm1464 = vweird.f32 %v1458
    %vm1465 = vmor %vm1463, %vm1464
    %v1466 = vsel %vm1465, %v1458, %v1462
    %v1467 = vand.u32 2147483647, %v652
    %vm1468 = vcmp.eq.f32.partialorder %v1467, 8.507059e+37
    %v1469 = vand.u32 %v652, 2147483648
    %v1470 = vor.u32 1.1754944e-38, %v1469
    %v1471 = vsel %vm1468, %v1470, %v1466
    %v1472 = vmul.f32 1.0, %v1471
    %v1473 = vrcp.pop %v653
    %v1474 = vmul.f32 %v653, %v1473
    %v1475 = vsub.f32 1.0, %v1474
    %v1476 = vmul.f32 %v1473, %v1475
    %v1477 = vadd.f32 %v1473, %v1476
    %vm1478 = vweird.f32 %v653
    %vm1479 = vweird.f32 %v1473
    %vm1480 = vmor %vm1478, %vm1479
    %v1481 = vsel %vm1480, %v1473, %v1477
    %v1482 = vand.u32 2147483647, %v653
    %vm1483 = vcmp.eq.f32.partialorder %v1482, 8.507059e+37
    %v1484 = vand.u32 %v653, 2147483648
    %v1485 = vor.u32 1.1754944e-38, %v1484
    %v1486 = vsel %vm1483, %v1485, %v1481
    %v1487 = vmul.f32 1.0, %v1486
    %v1488 = vrcp.pop %v654
    %v1489 = vmul.f32 %v654, %v1488
    %v1490 = vsub.f32 1.0, %v1489
    %v1491 = vmul.f32 %v1488, %v1490
    %v1492 = vadd.f32 %v1488, %v1491
    %vm1493 = vweird.f32 %v654
    %vm1494 = vweird.f32 %v1488
    %vm1495 = vmor %vm1493, %vm1494
    %v1496 = vsel %vm1495, %v1488, %v1492
    %v1497 = vand.u32 2147483647, %v654
    %vm1498 = vcmp.eq.f32.partialorder %v1497, 8.507059e+37
    %v1499 = vand.u32 %v654, 2147483648
    %v1500 = vor.u32 1.1754944e-38, %v1499
    %v1501 = vsel %vm1498, %v1500, %v1496
    %v1502 = vmul.f32 1.0, %v1501
    %v1503 = vrcp.pop %v655
    %v1504 = vmul.f32 %v655, %v1503
    %v1505 = vsub.f32 1.0, %v1504
    %v1506 = vmul.f32 %v1503, %v1505
    %v1507 = vadd.f32 %v1503, %v1506
    %vm1508 = vweird.f32 %v655
    %vm1509 = vweird.f32 %v1503
    %vm1510 = vmor %vm1508, %vm1509
    %v1511 = vsel %vm1510, %v1503, %v1507
    %v1512 = vand.u32 2147483647, %v655
    %vm1513 = vcmp.eq.f32.partialorder %v1512, 8.507059e+37
    %v1514 = vand.u32 %v655, 2147483648
    %v1515 = vor.u32 1.1754944e-38, %v1514
    %v1516 = vsel %vm1513, %v1515, %v1511
    %v1517 = vmul.f32 1.0, %v1516
    %v1518 = vrcp.pop %v656
    %v1519 = vmul.f32 %v656, %v1518
    %v1520 = vsub.f32 1.0, %v1519
    %v1521 = vmul.f32 %v1518, %v1520
    %v1522 = vadd.f32 %v1518, %v1521
    %vm1523 = vweird.f32 %v656
    %vm1524 = vweird.f32 %v1518
    %vm1525 = vmor %vm1523, %vm1524
    %v1526 = vsel %vm1525, %v1518, %v1522
    %v1527 = vand.u32 2147483647, %v656
    %vm1528 = vcmp.eq.f32.partialorder %v1527, 8.507059e+37
    %v1529 = vand.u32 %v656, 2147483648
    %v1530 = vor.u32 1.1754944e-38, %v1529
    %v1531 = vsel %vm1528, %v1530, %v1526
    %v1532 = vmul.f32 1.0, %v1531
    %v1533 = vrcp.pop %v657
    %v1534 = vmul.f32 %v657, %v1533
    %v1535 = vsub.f32 1.0, %v1534
    %v1536 = vmul.f32 %v1533, %v1535
    %v1537 = vadd.f32 %v1533, %v1536
    %vm1538 = vweird.f32 %v657
    %vm1539 = vweird.f32 %v1533
    %vm1540 = vmor %vm1538, %vm1539
    %v1541 = vsel %vm1540, %v1533, %v1537
    %v1542 = vand.u32 2147483647, %v657
    %vm1543 = vcmp.eq.f32.partialorder %v1542, 8.507059e+37
    %v1544 = vand.u32 %v657, 2147483648
    %v1545 = vor.u32 1.1754944e-38, %v1544
    %v1546 = vsel %vm1543, %v1545, %v1541
    %v1547 = vmul.f32 1.0, %v1546
    %v1548 = vrcp.pop %v658
    %v1549 = vmul.f32 %v658, %v1548
    %v1550 = vsub.f32 1.0, %v1549
    %v1551 = vmul.f32 %v1548, %v1550
    %v1552 = vadd.f32 %v1548, %v1551
    %vm1553 = vweird.f32 %v658
    %vm1554 = vweird.f32 %v1548
    %vm1555 = vmor %vm1553, %vm1554
    %v1556 = vsel %vm1555, %v1548, %v1552
    %v1557 = vand.u32 2147483647, %v658
    %vm1558 = vcmp.eq.f32.partialorder %v1557, 8.507059e+37
    %v1559 = vand.u32 %v658, 2147483648
    %v1560 = vor.u32 1.1754944e-38, %v1559
    %v1561 = vsel %vm1558, %v1560, %v1556
    %v1562 = vmul.f32 1.0, %v1561
    %v1563 = vrcp.pop %v659
    %v1564 = vmul.f32 %v659, %v1563
    %v1565 = vsub.f32 1.0, %v1564
    %v1566 = vmul.f32 %v1563, %v1565
    %v1567 = vadd.f32 %v1563, %v1566
    %vm1568 = vweird.f32 %v659
    %vm1569 = vweird.f32 %v1563
    %vm1570 = vmor %vm1568, %vm1569
    %v1571 = vsel %vm1570, %v1563, %v1567
    %v1572 = vand.u32 2147483647, %v659
    %vm1573 = vcmp.eq.f32.partialorder %v1572, 8.507059e+37
    %v1574 = vand.u32 %v659, 2147483648
    %v1575 = vor.u32 1.1754944e-38, %v1574
    %v1576 = vsel %vm1573, %v1575, %v1571
    %v1577 = vmul.f32 1.0, %v1576
    %v1578 = vrcp.pop %v660
    %v1579 = vmul.f32 %v660, %v1578
    %v1580 = vsub.f32 1.0, %v1579
    %v1581 = vmul.f32 %v1578, %v1580
    %v1582 = vadd.f32 %v1578, %v1581
    %vm1583 = vweird.f32 %v660
    %vm1584 = vweird.f32 %v1578
    %vm1585 = vmor %vm1583, %vm1584
    %v1586 = vsel %vm1585, %v1578, %v1582
    %v1587 = vand.u32 2147483647, %v660
    %vm1588 = vcmp.eq.f32.partialorder %v1587, 8.507059e+37
    %v1589 = vand.u32 %v660, 2147483648
    %v1590 = vor.u32 1.1754944e-38, %v1589
    %v1591 = vsel %vm1588, %v1590, %v1586
    %v1592 = vmul.f32 1.0, %v1591
    %v1593 = vrcp.pop %v661
    %v1594 = vmul.f32 %v661, %v1593
    %v1595 = vsub.f32 1.0, %v1594
    %v1596 = vmul.f32 %v1593, %v1595
    %v1597 = vadd.f32 %v1593, %v1596
    %vm1598 = vweird.f32 %v661
    %vm1599 = vweird.f32 %v1593
    %vm1600 = vmor %vm1598, %vm1599
    %v1601 = vsel %vm1600, %v1593, %v1597
    %v1602 = vand.u32 2147483647, %v661
    %vm1603 = vcmp.eq.f32.partialorder %v1602, 8.507059e+37
    %v1604 = vand.u32 %v661, 2147483648
    %v1605 = vor.u32 1.1754944e-38, %v1604
    %v1606 = vsel %vm1603, %v1605, %v1601
    %v1607 = vmul.f32 1.0, %v1606
    %v1608 = vrcp.pop %v662
    %v1609 = vmul.f32 %v662, %v1608
    %v1610 = vsub.f32 1.0, %v1609
    %v1611 = vmul.f32 %v1608, %v1610
    %v1612 = vadd.f32 %v1608, %v1611
    %vm1613 = vweird.f32 %v662
    %vm1614 = vweird.f32 %v1608
    %vm1615 = vmor %vm1613, %vm1614
    %v1616 = vsel %vm1615, %v1608, %v1612
    %v1617 = vand.u32 2147483647, %v662
    %vm1618 = vcmp.eq.f32.partialorder %v1617, 8.507059e+37
    %v1619 = vand.u32 %v662, 2147483648
    %v1620 = vor.u32 1.1754944e-38, %v1619
    %v1621 = vsel %vm1618, %v1620, %v1616
    %v1622 = vmul.f32 1.0, %v1621
    %v1687 = vperm.slane %v677, 0
    %v1688 = vperm.slane %v677, 1
    %v1689 = vperm.slane %v677, 2
    %v1690 = vperm.slane %v677, 3
    %v1691 = vperm.slane %v677, 4
    %v1692 = vperm.slane %v677, 5
    %v1693 = vperm.slane %v677, 6
    %v1694 = vperm.slane %v677, 7
    %v1695 = vperm.slane %v692, 0
    %v1696 = vperm.slane %v692, 1
    %v1697 = vperm.slane %v692, 2
    %v1698 = vperm.slane %v692, 3
    %v1699 = vperm.slane %v692, 4
    %v1700 = vperm.slane %v692, 5
    %v1701 = vperm.slane %v692, 6
    %v1702 = vperm.slane %v692, 7
    %v1703 = vperm.slane %v707, 0
    %v1704 = vperm.slane %v707, 1
    %v1705 = vperm.slane %v707, 2
    %v1706 = vperm.slane %v707, 3
    %v1707 = vperm.slane %v707, 4
    %v1708 = vperm.slane %v707, 5
    %v1709 = vperm.slane %v707, 6
    %v1710 = vperm.slane %v707, 7
    %v1711 = vperm.slane %v722, 0
    %v1712 = vperm.slane %v722, 1
    %v1713 = vperm.slane %v722, 2
    %v1714 = vperm.slane %v722, 3
    %v1715 = vperm.slane %v722, 4
    %v1716 = vperm.slane %v722, 5
    %v1717 = vperm.slane %v722, 6
    %v1718 = vperm.slane %v722, 7
    %v1719 = vperm.slane %v737, 0
    %v1720 = vperm.slane %v737, 1
    %v1721 = vperm.slane %v737, 2
    %v1722 = vperm.slane %v737, 3
    %v1723 = vperm.slane %v737, 4
    %v1724 = vperm.slane %v737, 5
    %v1725 = vperm.slane %v737, 6
    %v1726 = vperm.slane %v737, 7
    %v1727 = vperm.slane %v752, 0
    %v1728 = vperm.slane %v752, 1
    %v1729 = vperm.slane %v752, 2
    %v1730 = vperm.slane %v752, 3
    %v1731 = vperm.slane %v752, 4
    %v1732 = vperm.slane %v752, 5
    %v1733 = vperm.slane %v752, 6
    %v1734 = vperm.slane %v752, 7
    %v1735 = vperm.slane %v767, 0
    %v1736 = vperm.slane %v767, 1
    %v1737 = vperm.slane %v767, 2
    %v1738 = vperm.slane %v767, 3
    %v1739 = vperm.slane %v767, 4
    %v1740 = vperm.slane %v767, 5
    %v1741 = vperm.slane %v767, 6
    %v1742 = vperm.slane %v767, 7
    %v1743 = vperm.slane %v782, 0
    %v1744 = vperm.slane %v782, 1
    %v1745 = vperm.slane %v782, 2
    %v1746 = vperm.slane %v782, 3
    %v1747 = vperm.slane %v782, 4
    %v1748 = vperm.slane %v782, 5
    %v1749 = vperm.slane %v782, 6
    %v1750 = vperm.slane %v782, 7
    %v1751 = vperm.slane %v797, 0
    %v1752 = vperm.slane %v797, 1
    %v1753 = vperm.slane %v797, 2
    %v1754 = vperm.slane %v797, 3
    %v1755 = vperm.slane %v797, 4
    %v1756 = vperm.slane %v797, 5
    %v1757 = vperm.slane %v797, 6
    %v1758 = vperm.slane %v797, 7
    %v1759 = vperm.slane %v812, 0
    %v1760 = vperm.slane %v812, 1
    %v1761 = vperm.slane %v812, 2
    %v1762 = vperm.slane %v812, 3
    %v1763 = vperm.slane %v812, 4
    %v1764 = vperm.slane %v812, 5
    %v1765 = vperm.slane %v812, 6
    %v1766 = vperm.slane %v812, 7
    %v1767 = vperm.slane %v827, 0
    %v1768 = vperm.slane %v827, 1
    %v1769 = vperm.slane %v827, 2
    %v1770 = vperm.slane %v827, 3
    %v1771 = vperm.slane %v827, 4
    %v1772 = vperm.slane %v827, 5
    %v1773 = vperm.slane %v827, 6
    %v1774 = vperm.slane %v827, 7
    %v1775 = vperm.slane %v842, 0
    %v1776 = vperm.slane %v842, 1
    %v1777 = vperm.slane %v842, 2
    %v1778 = vperm.slane %v842, 3
    %v1779 = vperm.slane %v842, 4
    %v1780 = vperm.slane %v842, 5
    %v1781 = vperm.slane %v842, 6
    %v1782 = vperm.slane %v842, 7
    %v1783 = vperm.slane %v857, 0
    %v1784 = vperm.slane %v857, 1
    %v1785 = vperm.slane %v857, 2
    %v1786 = vperm.slane %v857, 3
    %v1787 = vperm.slane %v857, 4
    %v1788 = vperm.slane %v857, 5
    %v1789 = vperm.slane %v857, 6
    %v1790 = vperm.slane %v857, 7
    %v1791 = vperm.slane %v872, 0
    %v1792 = vperm.slane %v872, 1
    %v1793 = vperm.slane %v872, 2
    %v1794 = vperm.slane %v872, 3
    %v1795 = vperm.slane %v872, 4
    %v1796 = vperm.slane %v872, 5
    %v1797 = vperm.slane %v872, 6
    %v1798 = vperm.slane %v872, 7
    %v1799 = vperm.slane %v887, 0
    %v1800 = vperm.slane %v887, 1
    %v1801 = vperm.slane %v887, 2
    %v1802 = vperm.slane %v887, 3
    %v1803 = vperm.slane %v887, 4
    %v1804 = vperm.slane %v887, 5
    %v1805 = vperm.slane %v887, 6
    %v1806 = vperm.slane %v887, 7
    %v1807 = vperm.slane %v902, 0
    %v1808 = vperm.slane %v902, 1
    %v1809 = vperm.slane %v902, 2
    %v1810 = vperm.slane %v902, 3
    %v1811 = vperm.slane %v902, 4
    %v1812 = vperm.slane %v902, 5
    %v1813 = vperm.slane %v902, 6
    %v1814 = vperm.slane %v902, 7
    %v1815 = vperm.slane %v917, 0
    %v1816 = vperm.slane %v917, 1
    %v1817 = vperm.slane %v917, 2
    %v1818 = vperm.slane %v917, 3
    %v1819 = vperm.slane %v917, 4
    %v1820 = vperm.slane %v917, 5
    %v1821 = vperm.slane %v917, 6
    %v1822 = vperm.slane %v917, 7
    %v1823 = vperm.slane %v932, 0
    %v1824 = vperm.slane %v932, 1
    %v1825 = vperm.slane %v932, 2
    %v1826 = vperm.slane %v932, 3
    %v1827 = vperm.slane %v932, 4
    %v1828 = vperm.slane %v932, 5
    %v1829 = vperm.slane %v932, 6
    %v1830 = vperm.slane %v932, 7
    %v1831 = vperm.slane %v947, 0
    %v1832 = vperm.slane %v947, 1
    %v1833 = vperm.slane %v947, 2
    %v1834 = vperm.slane %v947, 3
    %v1835 = vperm.slane %v947, 4
    %v1836 = vperm.slane %v947, 5
    %v1837 = vperm.slane %v947, 6
    %v1838 = vperm.slane %v947, 7
    %v1839 = vperm.slane %v962, 0
    %v1840 = vperm.slane %v962, 1
    %v1841 = vperm.slane %v962, 2
    %v1842 = vperm.slane %v962, 3
    %v1843 = vperm.slane %v962, 4
    %v1844 = vperm.slane %v962, 5
    %v1845 = vperm.slane %v962, 6
    %v1846 = vperm.slane %v962, 7
    %v1847 = vperm.slane %v977, 0
    %v1848 = vperm.slane %v977, 1
    %v1849 = vperm.slane %v977, 2
    %v1850 = vperm.slane %v977, 3
    %v1851 = vperm.slane %v977, 4
    %v1852 = vperm.slane %v977, 5
    %v1853 = vperm.slane %v977, 6
    %v1854 = vperm.slane %v977, 7
    %v1855 = vperm.slane %v992, 0
    %v1856 = vperm.slane %v992, 1
    %v1857 = vperm.slane %v992, 2
    %v1858 = vperm.slane %v992, 3
    %v1859 = vperm.slane %v992, 4
    %v1860 = vperm.slane %v992, 5
    %v1861 = vperm.slane %v992, 6
    %v1862 = vperm.slane %v992, 7
    %v1863 = vperm.slane %v1007, 0
    %v1864 = vperm.slane %v1007, 1
    %v1865 = vperm.slane %v1007, 2
    %v1866 = vperm.slane %v1007, 3
    %v1867 = vperm.slane %v1007, 4
    %v1868 = vperm.slane %v1007, 5
    %v1869 = vperm.slane %v1007, 6
    %v1870 = vperm.slane %v1007, 7
    %v1871 = vperm.slane %v1022, 0
    %v1872 = vperm.slane %v1022, 1
    %v1873 = vperm.slane %v1022, 2
    %v1874 = vperm.slane %v1022, 3
    %v1875 = vperm.slane %v1022, 4
    %v1876 = vperm.slane %v1022, 5
    %v1877 = vperm.slane %v1022, 6
    %v1878 = vperm.slane %v1022, 7
    %v1879 = vperm.slane %v1037, 0
    %v1880 = vperm.slane %v1037, 1
    %v1881 = vperm.slane %v1037, 2
    %v1882 = vperm.slane %v1037, 3
    %v1883 = vperm.slane %v1037, 4
    %v1884 = vperm.slane %v1037, 5
    %v1885 = vperm.slane %v1037, 6
    %v1886 = vperm.slane %v1037, 7
    %v1887 = vperm.slane %v1052, 0
    %v1888 = vperm.slane %v1052, 1
    %v1889 = vperm.slane %v1052, 2
    %v1890 = vperm.slane %v1052, 3
    %v1891 = vperm.slane %v1052, 4
    %v1892 = vperm.slane %v1052, 5
    %v1893 = vperm.slane %v1052, 6
    %v1894 = vperm.slane %v1052, 7
    %v1895 = vperm.slane %v1067, 0
    %v1896 = vperm.slane %v1067, 1
    %v1897 = vperm.slane %v1067, 2
    %v1898 = vperm.slane %v1067, 3
    %v1899 = vperm.slane %v1067, 4
    %v1900 = vperm.slane %v1067, 5
    %v1901 = vperm.slane %v1067, 6
    %v1902 = vperm.slane %v1067, 7
    %v1903 = vperm.slane %v1082, 0
    %v1904 = vperm.slane %v1082, 1
    %v1905 = vperm.slane %v1082, 2
    %v1906 = vperm.slane %v1082, 3
    %v1907 = vperm.slane %v1082, 4
    %v1908 = vperm.slane %v1082, 5
    %v1909 = vperm.slane %v1082, 6
    %v1910 = vperm.slane %v1082, 7
    %v1911 = vperm.slane %v1097, 0
    %v1912 = vperm.slane %v1097, 1
    %v1913 = vperm.slane %v1097, 2
    %v1914 = vperm.slane %v1097, 3
    %v1915 = vperm.slane %v1097, 4
    %v1916 = vperm.slane %v1097, 5
    %v1917 = vperm.slane %v1097, 6
    %v1918 = vperm.slane %v1097, 7
    %v1919 = vperm.slane %v1112, 0
    %v1920 = vperm.slane %v1112, 1
    %v1921 = vperm.slane %v1112, 2
    %v1922 = vperm.slane %v1112, 3
    %v1923 = vperm.slane %v1112, 4
    %v1924 = vperm.slane %v1112, 5
    %v1925 = vperm.slane %v1112, 6
    %v1926 = vperm.slane %v1112, 7
    %v1927 = vperm.slane %v1127, 0
    %v1928 = vperm.slane %v1127, 1
    %v1929 = vperm.slane %v1127, 2
    %v1930 = vperm.slane %v1127, 3
    %v1931 = vperm.slane %v1127, 4
    %v1932 = vperm.slane %v1127, 5
    %v1933 = vperm.slane %v1127, 6
    %v1934 = vperm.slane %v1127, 7
    %v1935 = vperm.slane %v1142, 0
    %v1936 = vperm.slane %v1142, 1
    %v1937 = vperm.slane %v1142, 2
    %v1938 = vperm.slane %v1142, 3
    %v1939 = vperm.slane %v1142, 4
    %v1940 = vperm.slane %v1142, 5
    %v1941 = vperm.slane %v1142, 6
    %v1942 = vperm.slane %v1142, 7
    %v1943 = vperm.slane %v1157, 0
    %v1944 = vperm.slane %v1157, 1
    %v1945 = vperm.slane %v1157, 2
    %v1946 = vperm.slane %v1157, 3
    %v1947 = vperm.slane %v1157, 4
    %v1948 = vperm.slane %v1157, 5
    %v1949 = vperm.slane %v1157, 6
    %v1950 = vperm.slane %v1157, 7
    %v1951 = vperm.slane %v1172, 0
    %v1952 = vperm.slane %v1172, 1
    %v1953 = vperm.slane %v1172, 2
    %v1954 = vperm.slane %v1172, 3
    %v1955 = vperm.slane %v1172, 4
    %v1956 = vperm.slane %v1172, 5
    %v1957 = vperm.slane %v1172, 6
    %v1958 = vperm.slane %v1172, 7
    %v1959 = vperm.slane %v1187, 0
    %v1960 = vperm.slane %v1187, 1
    %v1961 = vperm.slane %v1187, 2
    %v1962 = vperm.slane %v1187, 3
    %v1963 = vperm.slane %v1187, 4
    %v1964 = vperm.slane %v1187, 5
    %v1965 = vperm.slane %v1187, 6
    %v1966 = vperm.slane %v1187, 7
    %v1967 = vperm.slane %v1202, 0
    %v1968 = vperm.slane %v1202, 1
    %v1969 = vperm.slane %v1202, 2
    %v1970 = vperm.slane %v1202, 3
    %v1971 = vperm.slane %v1202, 4
    %v1972 = vperm.slane %v1202, 5
    %v1973 = vperm.slane %v1202, 6
    %v1974 = vperm.slane %v1202, 7
    %v1975 = vperm.slane %v1217, 0
    %v1976 = vperm.slane %v1217, 1
    %v1977 = vperm.slane %v1217, 2
    %v1978 = vperm.slane %v1217, 3
    %v1979 = vperm.slane %v1217, 4
    %v1980 = vperm.slane %v1217, 5
    %v1981 = vperm.slane %v1217, 6
    %v1982 = vperm.slane %v1217, 7
    %v1983 = vperm.slane %v1232, 0
    %v1984 = vperm.slane %v1232, 1
    %v1985 = vperm.slane %v1232, 2
    %v1986 = vperm.slane %v1232, 3
    %v1987 = vperm.slane %v1232, 4
    %v1988 = vperm.slane %v1232, 5
    %v1989 = vperm.slane %v1232, 6
    %v1990 = vperm.slane %v1232, 7
    %v1991 = vperm.slane %v1247, 0
    %v1992 = vperm.slane %v1247, 1
    %v1993 = vperm.slane %v1247, 2
    %v1994 = vperm.slane %v1247, 3
    %v1995 = vperm.slane %v1247, 4
    %v1996 = vperm.slane %v1247, 5
    %v1997 = vperm.slane %v1247, 6
    %v1998 = vperm.slane %v1247, 7
    %v1999 = vperm.slane %v1262, 0
    %v2000 = vperm.slane %v1262, 1
    %v2001 = vperm.slane %v1262, 2
    %v2002 = vperm.slane %v1262, 3
    %v2003 = vperm.slane %v1262, 4
    %v2004 = vperm.slane %v1262, 5
    %v2005 = vperm.slane %v1262, 6
    %v2006 = vperm.slane %v1262, 7
    %v2007 = vperm.slane %v1277, 0
    %v2008 = vperm.slane %v1277, 1
    %v2009 = vperm.slane %v1277, 2
    %v2010 = vperm.slane %v1277, 3
    %v2011 = vperm.slane %v1277, 4
    %v2012 = vperm.slane %v1277, 5
    %v2013 = vperm.slane %v1277, 6
    %v2014 = vperm.slane %v1277, 7
    %v2015 = vperm.slane %v1292, 0
    %v2016 = vperm.slane %v1292, 1
    %v2017 = vperm.slane %v1292, 2
    %v2018 = vperm.slane %v1292, 3
    %v2019 = vperm.slane %v1292, 4
    %v2020 = vperm.slane %v1292, 5
    %v2021 = vperm.slane %v1292, 6
    %v2022 = vperm.slane %v1292, 7
    %v2023 = vperm.slane %v1307, 0
    %v2024 = vperm.slane %v1307, 1
    %v2025 = vperm.slane %v1307, 2
    %v2026 = vperm.slane %v1307, 3
    %v2027 = vperm.slane %v1307, 4
    %v2028 = vperm.slane %v1307, 5
    %v2029 = vperm.slane %v1307, 6
    %v2030 = vperm.slane %v1307, 7
    %v2031 = vperm.slane %v1322, 0
    %v2032 = vperm.slane %v1322, 1
    %v2033 = vperm.slane %v1322, 2
    %v2034 = vperm.slane %v1322, 3
    %v2035 = vperm.slane %v1322, 4
    %v2036 = vperm.slane %v1322, 5
    %v2037 = vperm.slane %v1322, 6
    %v2038 = vperm.slane %v1322, 7
    %v2039 = vperm.slane %v1337, 0
    %v2040 = vperm.slane %v1337, 1
    %v2041 = vperm.slane %v1337, 2
    %v2042 = vperm.slane %v1337, 3
    %v2043 = vperm.slane %v1337, 4
    %v2044 = vperm.slane %v1337, 5
    %v2045 = vperm.slane %v1337, 6
    %v2046 = vperm.slane %v1337, 7
    %v2047 = vperm.slane %v1352, 0
    %v2048 = vperm.slane %v1352, 1
    %v2049 = vperm.slane %v1352, 2
    %v2050 = vperm.slane %v1352, 3
    %v2051 = vperm.slane %v1352, 4
    %v2052 = vperm.slane %v1352, 5
    %v2053 = vperm.slane %v1352, 6
    %v2054 = vperm.slane %v1352, 7
    %v2055 = vperm.slane %v1367, 0
    %v2056 = vperm.slane %v1367, 1
    %v2057 = vperm.slane %v1367, 2
    %v2058 = vperm.slane %v1367, 3
    %v2059 = vperm.slane %v1367, 4
    %v2060 = vperm.slane %v1367, 5
    %v2061 = vperm.slane %v1367, 6
    %v2062 = vperm.slane %v1367, 7
    %v2063 = vperm.slane %v1382, 0
    %v2064 = vperm.slane %v1382, 1
    %v2065 = vperm.slane %v1382, 2
    %v2066 = vperm.slane %v1382, 3
    %v2067 = vperm.slane %v1382, 4
    %v2068 = vperm.slane %v1382, 5
    %v2069 = vperm.slane %v1382, 6
    %v2070 = vperm.slane %v1382, 7
    %v2071 = vperm.slane %v1397, 0
    %v2072 = vperm.slane %v1397, 1
    %v2073 = vperm.slane %v1397, 2
    %v2074 = vperm.slane %v1397, 3
    %v2075 = vperm.slane %v1397, 4
    %v2076 = vperm.slane %v1397, 5
    %v2077 = vperm.slane %v1397, 6
    %v2078 = vperm.slane %v1397, 7
    %v2079 = vperm.slane %v1412, 0
    %v2080 = vperm.slane %v1412, 1
    %v2081 = vperm.slane %v1412, 2
    %v2082 = vperm.slane %v1412, 3
    %v2083 = vperm.slane %v1412, 4
    %v2084 = vperm.slane %v1412, 5
    %v2085 = vperm.slane %v1412, 6
    %v2086 = vperm.slane %v1412, 7
    %v2087 = vperm.slane %v1427, 0
    %v2088 = vperm.slane %v1427, 1
    %v2089 = vperm.slane %v1427, 2
    %v2090 = vperm.slane %v1427, 3
    %v2091 = vperm.slane %v1427, 4
    %v2092 = vperm.slane %v1427, 5
    %v2093 = vperm.slane %v1427, 6
    %v2094 = vperm.slane %v1427, 7
    %v2095 = vperm.slane %v1442, 0
    %v2096 = vperm.slane %v1442, 1
    %v2097 = vperm.slane %v1442, 2
    %v2098 = vperm.slane %v1442, 3
    %v2099 = vperm.slane %v1442, 4
    %v2100 = vperm.slane %v1442, 5
    %v2101 = vperm.slane %v1442, 6
    %v2102 = vperm.slane %v1442, 7
    %v2103 = vperm.slane %v1457, 0
    %v2104 = vperm.slane %v1457, 1
    %v2105 = vperm.slane %v1457, 2
    %v2106 = vperm.slane %v1457, 3
    %v2107 = vperm.slane %v1457, 4
    %v2108 = vperm.slane %v1457, 5
    %v2109 = vperm.slane %v1457, 6
    %v2110 = vperm.slane %v1457, 7
    %v2111 = vperm.slane %v1472, 0
    %v2112 = vperm.slane %v1472, 1
    %v2113 = vperm.slane %v1472, 2
    %v2114 = vperm.slane %v1472, 3
    %v2115 = vperm.slane %v1472, 4
    %v2116 = vperm.slane %v1472, 5
    %v2117 = vperm.slane %v1472, 6
    %v2118 = vperm.slane %v1472, 7
    %v2119 = vperm.slane %v1487, 0
    %v2120 = vperm.slane %v1487, 1
    %v2121 = vperm.slane %v1487, 2
    %v2122 = vperm.slane %v1487, 3
    %v2123 = vperm.slane %v1487, 4
    %v2124 = vperm.slane %v1487, 5
    %v2125 = vperm.slane %v1487, 6
    %v2126 = vperm.slane %v1487, 7
    %v2127 = vperm.slane %v1502, 0
    %v2128 = vperm.slane %v1502, 1
    %v2129 = vperm.slane %v1502, 2
    %v2130 = vperm.slane %v1502, 3
    %v2131 = vperm.slane %v1502, 4
    %v2132 = vperm.slane %v1502, 5
    %v2133 = vperm.slane %v1502, 6
    %v2134 = vperm.slane %v1502, 7
    %v2135 = vperm.slane %v1517, 0
    %v2136 = vperm.slane %v1517, 1
    %v2137 = vperm.slane %v1517, 2
    %v2138 = vperm.slane %v1517, 3
    %v2139 = vperm.slane %v1517, 4
    %v2140 = vperm.slane %v1517, 5
    %v2141 = vperm.slane %v1517, 6
    %v2142 = vperm.slane %v1517, 7
    %v2143 = vperm.slane %v1532, 0
    %v2144 = vperm.slane %v1532, 1
    %v2145 = vperm.slane %v1532, 2
    %v2146 = vperm.slane %v1532, 3
    %v2147 = vperm.slane %v1532, 4
    %v2148 = vperm.slane %v1532, 5
    %v2149 = vperm.slane %v1532, 6
    %v2150 = vperm.slane %v1532, 7
    %v2151 = vperm.slane %v1547, 0
    %v2152 = vperm.slane %v1547, 1
    %v2153 = vperm.slane %v1547, 2
    %v2154 = vperm.slane %v1547, 3
    %v2155 = vperm.slane %v1547, 4
    %v2156 = vperm.slane %v1547, 5
    %v2157 = vperm.slane %v1547, 6
    %v2158 = vperm.slane %v1547, 7
    %v2159 = vperm.slane %v1562, 0
    %v2160 = vperm.slane %v1562, 1
    %v2161 = vperm.slane %v1562, 2
    %v2162 = vperm.slane %v1562, 3
    %v2163 = vperm.slane %v1562, 4
    %v2164 = vperm.slane %v1562, 5
    %v2165 = vperm.slane %v1562, 6
    %v2166 = vperm.slane %v1562, 7
    %v2167 = vperm.slane %v1577, 0
    %v2168 = vperm.slane %v1577, 1
    %v2169 = vperm.slane %v1577, 2
    %v2170 = vperm.slane %v1577, 3
    %v2171 = vperm.slane %v1577, 4
    %v2172 = vperm.slane %v1577, 5
    %v2173 = vperm.slane %v1577, 6
    %v2174 = vperm.slane %v1577, 7
    %v2175 = vperm.slane %v1592, 0
    %v2176 = vperm.slane %v1592, 1
    %v2177 = vperm.slane %v1592, 2
    %v2178 = vperm.slane %v1592, 3
    %v2179 = vperm.slane %v1592, 4
    %v2180 = vperm.slane %v1592, 5
    %v2181 = vperm.slane %v1592, 6
    %v2182 = vperm.slane %v1592, 7
    %v2183 = vperm.slane %v1607, 0
    %v2184 = vperm.slane %v1607, 1
    %v2185 = vperm.slane %v1607, 2
    %v2186 = vperm.slane %v1607, 3
    %v2187 = vperm.slane %v1607, 4
    %v2188 = vperm.slane %v1607, 5
    %v2189 = vperm.slane %v1607, 6
    %v2190 = vperm.slane %v1607, 7
    %v2191 = vperm.slane %v1622, 0
    %v2192 = vperm.slane %v1622, 1
    %v2193 = vperm.slane %v1622, 2
    %v2194 = vperm.slane %v1622, 3
    %v2195 = vperm.slane %v1622, 4
    %v2196 = vperm.slane %v1622, 5
    %v2197 = vperm.slane %v1622, 6
    %v2198 = vperm.slane %v1622, 7
    %2199 = vst [vmem:[#allocation1] ss:$9 sm:$0xff] %v1687
    %s2200 = scalar_lea.vmem [#allocation1], 1
    %2201 = vst [vmem:[%s2200] ss:$9 sm:$0xff] %v1688
    %s2202 = scalar_lea.vmem [#allocation1], 2
    %2203 = vst [vmem:[%s2202] ss:$9 sm:$0xff] %v1689
    %s2204 = scalar_lea.vmem [#allocation1], 3
    %2205 = vst [vmem:[%s2204] ss:$9 sm:$0xff] %v1690
    %s2206 = scalar_lea.vmem [#allocation1], 4
    %2207 = vst [vmem:[%s2206] ss:$9 sm:$0xff] %v1691
    %s2208 = scalar_lea.vmem [#allocation1], 5
    %2209 = vst [vmem:[%s2208] ss:$9 sm:$0xff] %v1692
    %s2210 = scalar_lea.vmem [#allocation1], 6
    %2211 = vst [vmem:[%s2210] ss:$9 sm:$0xff] %v1693
    %s2212 = scalar_lea.vmem [#allocation1], 7
    %2213 = vst [vmem:[%s2212] ss:$9 sm:$0xff] %v1694
    %v2214 = vld [vmem:[#allocation1] sm:$0xff]
    %2215 = vst [vmem:[#allocation1] ss:$9 sm:$0xff] %v1695
    %2216 = vst [vmem:[%s2200] ss:$9 sm:$0xff] %v1696
    %2217 = vst [vmem:[%s2202] ss:$9 sm:$0xff] %v1697
    %2218 = vst [vmem:[%s2204] ss:$9 sm:$0xff] %v1698
    %2219 = vst [vmem:[%s2206] ss:$9 sm:$0xff] %v1699
    %2220 = vst [vmem:[%s2208] ss:$9 sm:$0xff] %v1700
    %2221 = vst [vmem:[%s2210] ss:$9 sm:$0xff] %v1701
    %2222 = vst [vmem:[%s2212] ss:$9 sm:$0xff] %v1702
    %v2223 = vld [vmem:[#allocation1] sm:$0xff]
    %2224 = vst [vmem:[#allocation1] ss:$9 sm:$0xff] %v1703
    %2225 = vst [vmem:[%s2200] ss:$9 sm:$0xff] %v1704
    %2226 = vst [vmem:[%s2202] ss:$9 sm:$0xff] %v1705
    %2227 = vst [vmem:[%s2204] ss:$9 sm:$0xff] %v1706
    %2228 = vst [vmem:[%s2206] ss:$9 sm:$0xff] %v1707
    %2229 = vst [vmem:[%s2208] ss:$9 sm:$0xff] %v1708
    %2230 = vst [vmem:[%s2210] ss:$9 sm:$0xff] %v1709
    %2231 = vst [vmem:[%s2212] ss:$9 sm:$0xff] %v1710
    %v2232 = vld [vmem:[#allocation1] sm:$0xff]
    %2233 = vst [vmem:[#allocation1] ss:$9 sm:$0xff] %v1711
    %2234 = vst [vmem:[%s2200] ss:$9 sm:$0xff] %v1712
    %2235 = vst [vmem:[%s2202] ss:$9 sm:$0xff] %v1713
    %2236 = vst [vmem:[%s2204] ss:$9 sm:$0xff] %v1714
    %2237 = vst [vmem:[%s2206] ss:$9 sm:$0xff] %v1715
    %2238 = vst [vmem:[%s2208] ss:$9 sm:$0xff] %v1716
    %2239 = vst [vmem:[%s2210] ss:$9 sm:$0xff] %v1717
    %2240 = vst [vmem:[%s2212] ss:$9 sm:$0xff] %v1718
    %v2241 = vld [vmem:[#allocation1] sm:$0xff]
    %2242 = vst [vmem:[#allocation1] ss:$9 sm:$0xff] %v1719
    %2243 = vst [vmem:[%s2200] ss:$9 sm:$0xff] %v1720
    %2244 = vst [vmem:[%s2202] ss:$9 sm:$0xff] %v1721
    %2245 = vst [vmem:[%s2204] ss:$9 sm:$0xff] %v1722
    %2246 = vst [vmem:[%s2206] ss:$9 sm:$0xff] %v1723
    %2247 = vst [vmem:[%s2208] ss:$9 sm:$0xff] %v1724
    %2248 = vst [vmem:[%s2210] ss:$9 sm:$0xff] %v1725
    %2249 = vst [vmem:[%s2212] ss:$9 sm:$0xff] %v1726
    %v2250 = vld [vmem:[#allocation1] sm:$0xff]
    %2251 = vst [vmem:[#allocation1] ss:$9 sm:$0xff] %v1727
    %2252 = vst [vmem:[%s2200] ss:$9 sm:$0xff] %v1728
    %2253 = vst [vmem:[%s2202] ss:$9 sm:$0xff] %v1729
    %2254 = vst [vmem:[%s2204] ss:$9 sm:$0xff] %v1730
    %2255 = vst [vmem:[%s2206] ss:$9 sm:$0xff] %v1731
    %2256 = vst [vmem:[%s2208] ss:$9 sm:$0xff] %v1732
    %2257 = vst [vmem:[%s2210] ss:$9 sm:$0xff] %v1733
    %2258 = vst [vmem:[%s2212] ss:$9 sm:$0xff] %v1734
    %v2259 = vld [vmem:[#allocation1] sm:$0xff]
    %2260 = vst [vmem:[#allocation1] ss:$9 sm:$0xff] %v1735
    %2261 = vst [vmem:[%s2200] ss:$9 sm:$0xff] %v1736
    %2262 = vst [vmem:[%s2202] ss:$9 sm:$0xff] %v1737
    %2263 = vst [vmem:[%s2204] ss:$9 sm:$0xff] %v1738
    %2264 = vst [vmem:[%s2206] ss:$9 sm:$0xff] %v1739
    %2265 = vst [vmem:[%s2208] ss:$9 sm:$0xff] %v1740
    %2266 = vst [vmem:[%s2210] ss:$9 sm:$0xff] %v1741
    %2267 = vst [vmem:[%s2212] ss:$9 sm:$0xff] %v1742
    %v2268 = vld [vmem:[#allocation1] sm:$0xff]
    %2269 = vst [vmem:[#allocation1] ss:$9 sm:$0xff] %v1743
    %2270 = vst [vmem:[%s2200] ss:$9 sm:$0xff] %v1744
    %2271 = vst [vmem:[%s2202] ss:$9 sm:$0xff] %v1745
    %2272 = vst [vmem:[%s2204] ss:$9 sm:$0xff] %v1746
    %2273 = vst [vmem:[%s2206] ss:$9 sm:$0xff] %v1747
    %2274 = vst [vmem:[%s2208] ss:$9 sm:$0xff] %v1748
    %2275 = vst [vmem:[%s2210] ss:$9 sm:$0xff] %v1749
    %2276 = vst [vmem:[%s2212] ss:$9 sm:$0xff] %v1750
    %v2277 = vld [vmem:[#allocation1] sm:$0xff]
    %2278 = vst [vmem:[#allocation1] ss:$9 sm:$0xff] %v1751
    %2279 = vst [vmem:[%s2200] ss:$9 sm:$0xff] %v1752
    %2280 = vst [vmem:[%s2202] ss:$9 sm:$0xff] %v1753
    %2281 = vst [vmem:[%s2204] ss:$9 sm:$0xff] %v1754
    %2282 = vst [vmem:[%s2206] ss:$9 sm:$0xff] %v1755
    %2283 = vst [vmem:[%s2208] ss:$9 sm:$0xff] %v1756
    %2284 = vst [vmem:[%s2210] ss:$9 sm:$0xff] %v1757
    %2285 = vst [vmem:[%s2212] ss:$9 sm:$0xff] %v1758
    %v2286 = vld [vmem:[#allocation1] sm:$0xff]
    %2287 = vst [vmem:[#allocation1] ss:$9 sm:$0xff] %v1759
    %2288 = vst [vmem:[%s2200] ss:$9 sm:$0xff] %v1760
    %2289 = vst [vmem:[%s2202] ss:$9 sm:$0xff] %v1761
    %2290 = vst [vmem:[%s2204] ss:$9 sm:$0xff] %v1762
    %2291 = vst [vmem:[%s2206] ss:$9 sm:$0xff] %v1763
    %2292 = vst [vmem:[%s2208] ss:$9 sm:$0xff] %v1764
    %2293 = vst [vmem:[%s2210] ss:$9 sm:$0xff] %v1765
    %2294 = vst [vmem:[%s2212] ss:$9 sm:$0xff] %v1766
    %v2295 = vld [vmem:[#allocation1] sm:$0xff]
    %2296 = vst [vmem:[#allocation1] ss:$9 sm:$0xff] %v1767
    %2297 = vst [vmem:[%s2200] ss:$9 sm:$0xff] %v1768
    %2298 = vst [vmem:[%s2202] ss:$9 sm:$0xff] %v1769
    %2299 = vst [vmem:[%s2204] ss:$9 sm:$0xff] %v1770
    %2300 = vst [vmem:[%s2206] ss:$9 sm:$0xff] %v1771
    %2301 = vst [vmem:[%s2208] ss:$9 sm:$0xff] %v1772
    %2302 = vst [vmem:[%s2210] ss:$9 sm:$0xff] %v1773
    %2303 = vst [vmem:[%s2212] ss:$9 sm:$0xff] %v1774
    %v2304 = vld [vmem:[#allocation1] sm:$0xff]
    %2305 = vst [vmem:[#allocation1] ss:$9 sm:$0xff] %v1775
    %2306 = vst [vmem:[%s2200] ss:$9 sm:$0xff] %v1776
    %2307 = vst [vmem:[%s2202] ss:$9 sm:$0xff] %v1777
    %2308 = vst [vmem:[%s2204] ss:$9 sm:$0xff] %v1778
    %2309 = vst [vmem:[%s2206] ss:$9 sm:$0xff] %v1779
    %2310 = vst [vmem:[%s2208] ss:$9 sm:$0xff] %v1780
    %2311 = vst [vmem:[%s2210] ss:$9 sm:$0xff] %v1781
    %2312 = vst [vmem:[%s2212] ss:$9 sm:$0xff] %v1782
    %v2313 = vld [vmem:[#allocation1] sm:$0xff]
    %2314 = vst [vmem:[#allocation1] ss:$9 sm:$0xff] %v1783
    %2315 = vst [vmem:[%s2200] ss:$9 sm:$0xff] %v1784
    %2316 = vst [vmem:[%s2202] ss:$9 sm:$0xff] %v1785
    %2317 = vst [vmem:[%s2204] ss:$9 sm:$0xff] %v1786
    %2318 = vst [vmem:[%s2206] ss:$9 sm:$0xff] %v1787
    %2319 = vst [vmem:[%s2208] ss:$9 sm:$0xff] %v1788
    %2320 = vst [vmem:[%s2210] ss:$9 sm:$0xff] %v1789
    %2321 = vst [vmem:[%s2212] ss:$9 sm:$0xff] %v1790
    %v2322 = vld [vmem:[#allocation1] sm:$0xff]
    %2323 = vst [vmem:[#allocation1] ss:$9 sm:$0xff] %v1791
    %2324 = vst [vmem:[%s2200] ss:$9 sm:$0xff] %v1792
    %2325 = vst [vmem:[%s2202] ss:$9 sm:$0xff] %v1793
    %2326 = vst [vmem:[%s2204] ss:$9 sm:$0xff] %v1794
    %2327 = vst [vmem:[%s2206] ss:$9 sm:$0xff] %v1795
    %2328 = vst [vmem:[%s2208] ss:$9 sm:$0xff] %v1796
    %2329 = vst [vmem:[%s2210] ss:$9 sm:$0xff] %v1797
    %2330 = vst [vmem:[%s2212] ss:$9 sm:$0xff] %v1798
    %v2331 = vld [vmem:[#allocation1] sm:$0xff]
    %2332 = vst [vmem:[#allocation1] ss:$9 sm:$0xff] %v1799
    %2333 = vst [vmem:[%s2200] ss:$9 sm:$0xff] %v1800
    %2334 = vst [vmem:[%s2202] ss:$9 sm:$0xff] %v1801
    %2335 = vst [vmem:[%s2204] ss:$9 sm:$0xff] %v1802
    %2336 = vst [vmem:[%s2206] ss:$9 sm:$0xff] %v1803
    %2337 = vst [vmem:[%s2208] ss:$9 sm:$0xff] %v1804
    %2338 = vst [vmem:[%s2210] ss:$9 sm:$0xff] %v1805
    %2339 = vst [vmem:[%s2212] ss:$9 sm:$0xff] %v1806
    %v2340 = vld [vmem:[#allocation1] sm:$0xff]
    %2341 = vst [vmem:[#allocation1] ss:$9 sm:$0xff] %v1807
    %2342 = vst [vmem:[%s2200] ss:$9 sm:$0xff] %v1808
    %2343 = vst [vmem:[%s2202] ss:$9 sm:$0xff] %v1809
    %2344 = vst [vmem:[%s2204] ss:$9 sm:$0xff] %v1810
    %2345 = vst [vmem:[%s2206] ss:$9 sm:$0xff] %v1811
    %2346 = vst [vmem:[%s2208] ss:$9 sm:$0xff] %v1812
    %2347 = vst [vmem:[%s2210] ss:$9 sm:$0xff] %v1813
    %2348 = vst [vmem:[%s2212] ss:$9 sm:$0xff] %v1814
    %v2349 = vld [vmem:[#allocation1] sm:$0xff]
    %2350 = vst [vmem:[#allocation1] ss:$9 sm:$0xff] %v1815
    %2351 = vst [vmem:[%s2200] ss:$9 sm:$0xff] %v1816
    %2352 = vst [vmem:[%s2202] ss:$9 sm:$0xff] %v1817
    %2353 = vst [vmem:[%s2204] ss:$9 sm:$0xff] %v1818
    %2354 = vst [vmem:[%s2206] ss:$9 sm:$0xff] %v1819
    %2355 = vst [vmem:[%s2208] ss:$9 sm:$0xff] %v1820
    %2356 = vst [vmem:[%s2210] ss:$9 sm:$0xff] %v1821
    %2357 = vst [vmem:[%s2212] ss:$9 sm:$0xff] %v1822
    %v2358 = vld [vmem:[#allocation1] sm:$0xff]
    %2359 = vst [vmem:[#allocation1] ss:$9 sm:$0xff] %v1823
    %2360 = vst [vmem:[%s2200] ss:$9 sm:$0xff] %v1824
    %2361 = vst [vmem:[%s2202] ss:$9 sm:$0xff] %v1825
    %2362 = vst [vmem:[%s2204] ss:$9 sm:$0xff] %v1826
    %2363 = vst [vmem:[%s2206] ss:$9 sm:$0xff] %v1827
    %2364 = vst [vmem:[%s2208] ss:$9 sm:$0xff] %v1828
    %2365 = vst [vmem:[%s2210] ss:$9 sm:$0xff] %v1829
    %2366 = vst [vmem:[%s2212] ss:$9 sm:$0xff] %v1830
    %v2367 = vld [vmem:[#allocation1] sm:$0xff]
    %2368 = vst [vmem:[#allocation1] ss:$9 sm:$0xff] %v1831
    %2369 = vst [vmem:[%s2200] ss:$9 sm:$0xff] %v1832
    %2370 = vst [vmem:[%s2202] ss:$9 sm:$0xff] %v1833
    %2371 = vst [vmem:[%s2204] ss:$9 sm:$0xff] %v1834
    %2372 = vst [vmem:[%s2206] ss:$9 sm:$0xff] %v1835
    %2373 = vst [vmem:[%s2208] ss:$9 sm:$0xff] %v1836
    %2374 = vst [vmem:[%s2210] ss:$9 sm:$0xff] %v1837
    %2375 = vst [vmem:[%s2212] ss:$9 sm:$0xff] %v1838
    %v2376 = vld [vmem:[#allocation1] sm:$0xff]
    %2377 = vst [vmem:[#allocation1] ss:$9 sm:$0xff] %v1839
    %2378 = vst [vmem:[%s2200] ss:$9 sm:$0xff] %v1840
    %2379 = vst [vmem:[%s2202] ss:$9 sm:$0xff] %v1841
    %2380 = vst [vmem:[%s2204] ss:$9 sm:$0xff] %v1842
    %2381 = vst [vmem:[%s2206] ss:$9 sm:$0xff] %v1843
    %2382 = vst [vmem:[%s2208] ss:$9 sm:$0xff] %v1844
    %2383 = vst [vmem:[%s2210] ss:$9 sm:$0xff] %v1845
    %2384 = vst [vmem:[%s2212] ss:$9 sm:$0xff] %v1846
    %v2385 = vld [vmem:[#allocation1] sm:$0xff]
    %2386 = vst [vmem:[#allocation1] ss:$9 sm:$0xff] %v1847
    %2387 = vst [vmem:[%s2200] ss:$9 sm:$0xff] %v1848
    %2388 = vst [vmem:[%s2202] ss:$9 sm:$0xff] %v1849
    %2389 = vst [vmem:[%s2204] ss:$9 sm:$0xff] %v1850
    %2390 = vst [vmem:[%s2206] ss:$9 sm:$0xff] %v1851
    %2391 = vst [vmem:[%s2208] ss:$9 sm:$0xff] %v1852
    %2392 = vst [vmem:[%s2210] ss:$9 sm:$0xff] %v1853
    %2393 = vst [vmem:[%s2212] ss:$9 sm:$0xff] %v1854
    %v2394 = vld [vmem:[#allocation1] sm:$0xff]
    %2395 = vst [vmem:[#allocation1] ss:$9 sm:$0xff] %v1855
    %2396 = vst [vmem:[%s2200] ss:$9 sm:$0xff] %v1856
    %2397 = vst [vmem:[%s2202] ss:$9 sm:$0xff] %v1857
    %2398 = vst [vmem:[%s2204] ss:$9 sm:$0xff] %v1858
    %2399 = vst [vmem:[%s2206] ss:$9 sm:$0xff] %v1859
    %2400 = vst [vmem:[%s2208] ss:$9 sm:$0xff] %v1860
    %2401 = vst [vmem:[%s2210] ss:$9 sm:$0xff] %v1861
    %2402 = vst [vmem:[%s2212] ss:$9 sm:$0xff] %v1862
    %v2403 = vld [vmem:[#allocation1] sm:$0xff]
    %2404 = vst [vmem:[#allocation1] ss:$9 sm:$0xff] %v1863
    %2405 = vst [vmem:[%s2200] ss:$9 sm:$0xff] %v1864
    %2406 = vst [vmem:[%s2202] ss:$9 sm:$0xff] %v1865
    %2407 = vst [vmem:[%s2204] ss:$9 sm:$0xff] %v1866
    %2408 = vst [vmem:[%s2206] ss:$9 sm:$0xff] %v1867
    %2409 = vst [vmem:[%s2208] ss:$9 sm:$0xff] %v1868
    %2410 = vst [vmem:[%s2210] ss:$9 sm:$0xff] %v1869
    %2411 = vst [vmem:[%s2212] ss:$9 sm:$0xff] %v1870
    %v2412 = vld [vmem:[#allocation1] sm:$0xff]
    %2413 = vst [vmem:[#allocation1] ss:$9 sm:$0xff] %v1871
    %2414 = vst [vmem:[%s2200] ss:$9 sm:$0xff] %v1872
    %2415 = vst [vmem:[%s2202] ss:$9 sm:$0xff] %v1873
    %2416 = vst [vmem:[%s2204] ss:$9 sm:$0xff] %v1874
    %2417 = vst [vmem:[%s2206] ss:$9 sm:$0xff] %v1875
    %2418 = vst [vmem:[%s2208] ss:$9 sm:$0xff] %v1876
    %2419 = vst [vmem:[%s2210] ss:$9 sm:$0xff] %v1877
    %2420 = vst [vmem:[%s2212] ss:$9 sm:$0xff] %v1878
    %v2421 = vld [vmem:[#allocation1] sm:$0xff]
    %2422 = vst [vmem:[#allocation1] ss:$9 sm:$0xff] %v1879
    %2423 = vst [vmem:[%s2200] ss:$9 sm:$0xff] %v1880
    %2424 = vst [vmem:[%s2202] ss:$9 sm:$0xff] %v1881
    %2425 = vst [vmem:[%s2204] ss:$9 sm:$0xff] %v1882
    %2426 = vst [vmem:[%s2206] ss:$9 sm:$0xff] %v1883
    %2427 = vst [vmem:[%s2208] ss:$9 sm:$0xff] %v1884
    %2428 = vst [vmem:[%s2210] ss:$9 sm:$0xff] %v1885
    %2429 = vst [vmem:[%s2212] ss:$9 sm:$0xff] %v1886
    %v2430 = vld [vmem:[#allocation1] sm:$0xff]
    %2431 = vst [vmem:[#allocation1] ss:$9 sm:$0xff] %v1887
    %2432 = vst [vmem:[%s2200] ss:$9 sm:$0xff] %v1888
    %2433 = vst [vmem:[%s2202] ss:$9 sm:$0xff] %v1889
    %2434 = vst [vmem:[%s2204] ss:$9 sm:$0xff] %v1890
    %2435 = vst [vmem:[%s2206] ss:$9 sm:$0xff] %v1891
    %2436 = vst [vmem:[%s2208] ss:$9 sm:$0xff] %v1892
    %2437 = vst [vmem:[%s2210] ss:$9 sm:$0xff] %v1893
    %2438 = vst [vmem:[%s2212] ss:$9 sm:$0xff] %v1894
    %v2439 = vld [vmem:[#allocation1] sm:$0xff]
    %2440 = vst [vmem:[#allocation1] ss:$9 sm:$0xff] %v1895
    %2441 = vst [vmem:[%s2200] ss:$9 sm:$0xff] %v1896
    %2442 = vst [vmem:[%s2202] ss:$9 sm:$0xff] %v1897
    %2443 = vst [vmem:[%s2204] ss:$9 sm:$0xff] %v1898
    %2444 = vst [vmem:[%s2206] ss:$9 sm:$0xff] %v1899
    %2445 = vst [vmem:[%s2208] ss:$9 sm:$0xff] %v1900
    %2446 = vst [vmem:[%s2210] ss:$9 sm:$0xff] %v1901
    %2447 = vst [vmem:[%s2212] ss:$9 sm:$0xff] %v1902
    %v2448 = vld [vmem:[#allocation1] sm:$0xff]
    %2449 = vst [vmem:[#allocation1] ss:$9 sm:$0xff] %v1903
    %2450 = vst [vmem:[%s2200] ss:$9 sm:$0xff] %v1904
    %2451 = vst [vmem:[%s2202] ss:$9 sm:$0xff] %v1905
    %2452 = vst [vmem:[%s2204] ss:$9 sm:$0xff] %v1906
    %2453 = vst [vmem:[%s2206] ss:$9 sm:$0xff] %v1907
    %2454 = vst [vmem:[%s2208] ss:$9 sm:$0xff] %v1908
    %2455 = vst [vmem:[%s2210] ss:$9 sm:$0xff] %v1909
    %2456 = vst [vmem:[%s2212] ss:$9 sm:$0xff] %v1910
    %v2457 = vld [vmem:[#allocation1] sm:$0xff]
    %2458 = vst [vmem:[#allocation1] ss:$9 sm:$0xff] %v1911
    %2459 = vst [vmem:[%s2200] ss:$9 sm:$0xff] %v1912
    %2460 = vst [vmem:[%s2202] ss:$9 sm:$0xff] %v1913
    %2461 = vst [vmem:[%s2204] ss:$9 sm:$0xff] %v1914
    %2462 = vst [vmem:[%s2206] ss:$9 sm:$0xff] %v1915
    %2463 = vst [vmem:[%s2208] ss:$9 sm:$0xff] %v1916
    %2464 = vst [vmem:[%s2210] ss:$9 sm:$0xff] %v1917
    %2465 = vst [vmem:[%s2212] ss:$9 sm:$0xff] %v1918
    %v2466 = vld [vmem:[#allocation1] sm:$0xff]
    %2467 = vst [vmem:[#allocation1] ss:$9 sm:$0xff] %v1919
    %2468 = vst [vmem:[%s2200] ss:$9 sm:$0xff] %v1920
    %2469 = vst [vmem:[%s2202] ss:$9 sm:$0xff] %v1921
    %2470 = vst [vmem:[%s2204] ss:$9 sm:$0xff] %v1922
    %2471 = vst [vmem:[%s2206] ss:$9 sm:$0xff] %v1923
    %2472 = vst [vmem:[%s2208] ss:$9 sm:$0xff] %v1924
    %2473 = vst [vmem:[%s2210] ss:$9 sm:$0xff] %v1925
    %2474 = vst [vmem:[%s2212] ss:$9 sm:$0xff] %v1926
    %v2475 = vld [vmem:[#allocation1] sm:$0xff]
    %2476 = vst [vmem:[#allocation1] ss:$9 sm:$0xff] %v1927
    %2477 = vst [vmem:[%s2200] ss:$9 sm:$0xff] %v1928
    %2478 = vst [vmem:[%s2202] ss:$9 sm:$0xff] %v1929
    %2479 = vst [vmem:[%s2204] ss:$9 sm:$0xff] %v1930
    %2480 = vst [vmem:[%s2206] ss:$9 sm:$0xff] %v1931
    %2481 = vst [vmem:[%s2208] ss:$9 sm:$0xff] %v1932
    %2482 = vst [vmem:[%s2210] ss:$9 sm:$0xff] %v1933
    %2483 = vst [vmem:[%s2212] ss:$9 sm:$0xff] %v1934
    %v2484 = vld [vmem:[#allocation1] sm:$0xff]
    %2485 = vst [vmem:[#allocation1] ss:$9 sm:$0xff] %v1935
    %2486 = vst [vmem:[%s2200] ss:$9 sm:$0xff] %v1936
    %2487 = vst [vmem:[%s2202] ss:$9 sm:$0xff] %v1937
    %2488 = vst [vmem:[%s2204] ss:$9 sm:$0xff] %v1938
    %2489 = vst [vmem:[%s2206] ss:$9 sm:$0xff] %v1939
    %2490 = vst [vmem:[%s2208] ss:$9 sm:$0xff] %v1940
    %2491 = vst [vmem:[%s2210] ss:$9 sm:$0xff] %v1941
    %2492 = vst [vmem:[%s2212] ss:$9 sm:$0xff] %v1942
    %v2493 = vld [vmem:[#allocation1] sm:$0xff]
    %2494 = vst [vmem:[#allocation1] ss:$9 sm:$0xff] %v1943
    %2495 = vst [vmem:[%s2200] ss:$9 sm:$0xff] %v1944
    %2496 = vst [vmem:[%s2202] ss:$9 sm:$0xff] %v1945
    %2497 = vst [vmem:[%s2204] ss:$9 sm:$0xff] %v1946
    %2498 = vst [vmem:[%s2206] ss:$9 sm:$0xff] %v1947
    %2499 = vst [vmem:[%s2208] ss:$9 sm:$0xff] %v1948
    %2500 = vst [vmem:[%s2210] ss:$9 sm:$0xff] %v1949
    %2501 = vst [vmem:[%s2212] ss:$9 sm:$0xff] %v1950
    %v2502 = vld [vmem:[#allocation1] sm:$0xff]
    %2503 = vst [vmem:[#allocation1] ss:$9 sm:$0xff] %v1951
    %2504 = vst [vmem:[%s2200] ss:$9 sm:$0xff] %v1952
    %2505 = vst [vmem:[%s2202] ss:$9 sm:$0xff] %v1953
    %2506 = vst [vmem:[%s2204] ss:$9 sm:$0xff] %v1954
    %2507 = vst [vmem:[%s2206] ss:$9 sm:$0xff] %v1955
    %2508 = vst [vmem:[%s2208] ss:$9 sm:$0xff] %v1956
    %2509 = vst [vmem:[%s2210] ss:$9 sm:$0xff] %v1957
    %2510 = vst [vmem:[%s2212] ss:$9 sm:$0xff] %v1958
    %v2511 = vld [vmem:[#allocation1] sm:$0xff]
    %2512 = vst [vmem:[#allocation1] ss:$9 sm:$0xff] %v1959
    %2513 = vst [vmem:[%s2200] ss:$9 sm:$0xff] %v1960
    %2514 = vst [vmem:[%s2202] ss:$9 sm:$0xff] %v1961
    %2515 = vst [vmem:[%s2204] ss:$9 sm:$0xff] %v1962
    %2516 = vst [vmem:[%s2206] ss:$9 sm:$0xff] %v1963
    %2517 = vst [vmem:[%s2208] ss:$9 sm:$0xff] %v1964
    %2518 = vst [vmem:[%s2210] ss:$9 sm:$0xff] %v1965
    %2519 = vst [vmem:[%s2212] ss:$9 sm:$0xff] %v1966
    %v2520 = vld [vmem:[#allocation1] sm:$0xff]
    %2521 = vst [vmem:[#allocation1] ss:$9 sm:$0xff] %v1967
    %2522 = vst [vmem:[%s2200] ss:$9 sm:$0xff] %v1968
    %2523 = vst [vmem:[%s2202] ss:$9 sm:$0xff] %v1969
    %2524 = vst [vmem:[%s2204] ss:$9 sm:$0xff] %v1970
    %2525 = vst [vmem:[%s2206] ss:$9 sm:$0xff] %v1971
    %2526 = vst [vmem:[%s2208] ss:$9 sm:$0xff] %v1972
    %2527 = vst [vmem:[%s2210] ss:$9 sm:$0xff] %v1973
    %2528 = vst [vmem:[%s2212] ss:$9 sm:$0xff] %v1974
    %v2529 = vld [vmem:[#allocation1] sm:$0xff]
    %2530 = vst [vmem:[#allocation1] ss:$9 sm:$0xff] %v1975
    %2531 = vst [vmem:[%s2200] ss:$9 sm:$0xff] %v1976
    %2532 = vst [vmem:[%s2202] ss:$9 sm:$0xff] %v1977
    %2533 = vst [vmem:[%s2204] ss:$9 sm:$0xff] %v1978
    %2534 = vst [vmem:[%s2206] ss:$9 sm:$0xff] %v1979
    %2535 = vst [vmem:[%s2208] ss:$9 sm:$0xff] %v1980
    %2536 = vst [vmem:[%s2210] ss:$9 sm:$0xff] %v1981
    %2537 = vst [vmem:[%s2212] ss:$9 sm:$0xff] %v1982
    %v2538 = vld [vmem:[#allocation1] sm:$0xff]
    %2539 = vst [vmem:[#allocation1] ss:$9 sm:$0xff] %v1983
    %2540 = vst [vmem:[%s2200] ss:$9 sm:$0xff] %v1984
    %2541 = vst [vmem:[%s2202] ss:$9 sm:$0xff] %v1985
    %2542 = vst [vmem:[%s2204] ss:$9 sm:$0xff] %v1986
    %2543 = vst [vmem:[%s2206] ss:$9 sm:$0xff] %v1987
    %2544 = vst [vmem:[%s2208] ss:$9 sm:$0xff] %v1988
    %2545 = vst [vmem:[%s2210] ss:$9 sm:$0xff] %v1989
    %2546 = vst [vmem:[%s2212] ss:$9 sm:$0xff] %v1990
    %v2547 = vld [vmem:[#allocation1] sm:$0xff]
    %2548 = vst [vmem:[#allocation1] ss:$9 sm:$0xff] %v1991
    %2549 = vst [vmem:[%s2200] ss:$9 sm:$0xff] %v1992
    %2550 = vst [vmem:[%s2202] ss:$9 sm:$0xff] %v1993
    %2551 = vst [vmem:[%s2204] ss:$9 sm:$0xff] %v1994
    %2552 = vst [vmem:[%s2206] ss:$9 sm:$0xff] %v1995
    %2553 = vst [vmem:[%s2208] ss:$9 sm:$0xff] %v1996
    %2554 = vst [vmem:[%s2210] ss:$9 sm:$0xff] %v1997
    %2555 = vst [vmem:[%s2212] ss:$9 sm:$0xff] %v1998
    %v2556 = vld [vmem:[#allocation1] sm:$0xff]
    %2557 = vst [vmem:[#allocation1] ss:$9 sm:$0xff] %v1999
    %2558 = vst [vmem:[%s2200] ss:$9 sm:$0xff] %v2000
    %2559 = vst [vmem:[%s2202] ss:$9 sm:$0xff] %v2001
    %2560 = vst [vmem:[%s2204] ss:$9 sm:$0xff] %v2002
    %2561 = vst [vmem:[%s2206] ss:$9 sm:$0xff] %v2003
    %2562 = vst [vmem:[%s2208] ss:$9 sm:$0xff] %v2004
    %2563 = vst [vmem:[%s2210] ss:$9 sm:$0xff] %v2005
    %2564 = vst [vmem:[%s2212] ss:$9 sm:$0xff] %v2006
    %v2565 = vld [vmem:[#allocation1] sm:$0xff]
    %2566 = vst [vmem:[#allocation1] ss:$9 sm:$0xff] %v2007
    %2567 = vst [vmem:[%s2200] ss:$9 sm:$0xff] %v2008
    %2568 = vst [vmem:[%s2202] ss:$9 sm:$0xff] %v2009
    %2569 = vst [vmem:[%s2204] ss:$9 sm:$0xff] %v2010
    %2570 = vst [vmem:[%s2206] ss:$9 sm:$0xff] %v2011
    %2571 = vst [vmem:[%s2208] ss:$9 sm:$0xff] %v2012
    %2572 = vst [vmem:[%s2210] ss:$9 sm:$0xff] %v2013
    %2573 = vst [vmem:[%s2212] ss:$9 sm:$0xff] %v2014
    %v2574 = vld [vmem:[#allocation1] sm:$0xff]
    %2575 = vst [vmem:[#allocation1] ss:$9 sm:$0xff] %v2015
    %2576 = vst [vmem:[%s2200] ss:$9 sm:$0xff] %v2016
    %2577 = vst [vmem:[%s2202] ss:$9 sm:$0xff] %v2017
    %2578 = vst [vmem:[%s2204] ss:$9 sm:$0xff] %v2018
    %2579 = vst [vmem:[%s2206] ss:$9 sm:$0xff] %v2019
    %2580 = vst [vmem:[%s2208] ss:$9 sm:$0xff] %v2020
    %2581 = vst [vmem:[%s2210] ss:$9 sm:$0xff] %v2021
    %2582 = vst [vmem:[%s2212] ss:$9 sm:$0xff] %v2022
    %v2583 = vld [vmem:[#allocation1] sm:$0xff]
    %2584 = vst [vmem:[#allocation1] ss:$9 sm:$0xff] %v2023
    %2585 = vst [vmem:[%s2200] ss:$9 sm:$0xff] %v2024
    %2586 = vst [vmem:[%s2202] ss:$9 sm:$0xff] %v2025
    %2587 = vst [vmem:[%s2204] ss:$9 sm:$0xff] %v2026
    %2588 = vst [vmem:[%s2206] ss:$9 sm:$0xff] %v2027
    %2589 = vst [vmem:[%s2208] ss:$9 sm:$0xff] %v2028
    %2590 = vst [vmem:[%s2210] ss:$9 sm:$0xff] %v2029
    %2591 = vst [vmem:[%s2212] ss:$9 sm:$0xff] %v2030
    %v2592 = vld [vmem:[#allocation1] sm:$0xff]
    %2593 = vst [vmem:[#allocation1] ss:$9 sm:$0xff] %v2031
    %2594 = vst [vmem:[%s2200] ss:$9 sm:$0xff] %v2032
    %2595 = vst [vmem:[%s2202] ss:$9 sm:$0xff] %v2033
    %2596 = vst [vmem:[%s2204] ss:$9 sm:$0xff] %v2034
    %2597 = vst [vmem:[%s2206] ss:$9 sm:$0xff] %v2035
    %2598 = vst [vmem:[%s2208] ss:$9 sm:$0xff] %v2036
    %2599 = vst [vmem:[%s2210] ss:$9 sm:$0xff] %v2037
    %2600 = vst [vmem:[%s2212] ss:$9 sm:$0xff] %v2038
    %v2601 = vld [vmem:[#allocation1] sm:$0xff]
    %2602 = vst [vmem:[#allocation1] ss:$9 sm:$0xff] %v2039
    %2603 = vst [vmem:[%s2200] ss:$9 sm:$0xff] %v2040
    %2604 = vst [vmem:[%s2202] ss:$9 sm:$0xff] %v2041
    %2605 = vst [vmem:[%s2204] ss:$9 sm:$0xff] %v2042
    %2606 = vst [vmem:[%s2206] ss:$9 sm:$0xff] %v2043
    %2607 = vst [vmem:[%s2208] ss:$9 sm:$0xff] %v2044
    %2608 = vst [vmem:[%s2210] ss:$9 sm:$0xff] %v2045
    %2609 = vst [vmem:[%s2212] ss:$9 sm:$0xff] %v2046
    %v2610 = vld [vmem:[#allocation1] sm:$0xff]
    %2611 = vst [vmem:[#allocation1] ss:$9 sm:$0xff] %v2047
    %2612 = vst [vmem:[%s2200] ss:$9 sm:$0xff] %v2048
    %2613 = vst [vmem:[%s2202] ss:$9 sm:$0xff] %v2049
    %2614 = vst [vmem:[%s2204] ss:$9 sm:$0xff] %v2050
    %2615 = vst [vmem:[%s2206] ss:$9 sm:$0xff] %v2051
    %2616 = vst [vmem:[%s2208] ss:$9 sm:$0xff] %v2052
    %2617 = vst [vmem:[%s2210] ss:$9 sm:$0xff] %v2053
    %2618 = vst [vmem:[%s2212] ss:$9 sm:$0xff] %v2054
    %v2619 = vld [vmem:[#allocation1] sm:$0xff]
    %2620 = vst [vmem:[#allocation1] ss:$9 sm:$0xff] %v2055
    %2621 = vst [vmem:[%s2200] ss:$9 sm:$0xff] %v2056
    %2622 = vst [vmem:[%s2202] ss:$9 sm:$0xff] %v2057
    %2623 = vst [vmem:[%s2204] ss:$9 sm:$0xff] %v2058
    %2624 = vst [vmem:[%s2206] ss:$9 sm:$0xff] %v2059
    %2625 = vst [vmem:[%s2208] ss:$9 sm:$0xff] %v2060
    %2626 = vst [vmem:[%s2210] ss:$9 sm:$0xff] %v2061
    %2627 = vst [vmem:[%s2212] ss:$9 sm:$0xff] %v2062
    %v2628 = vld [vmem:[#allocation1] sm:$0xff]
    %2629 = vst [vmem:[#allocation1] ss:$9 sm:$0xff] %v2063
    %2630 = vst [vmem:[%s2200] ss:$9 sm:$0xff] %v2064
    %2631 = vst [vmem:[%s2202] ss:$9 sm:$0xff] %v2065
    %2632 = vst [vmem:[%s2204] ss:$9 sm:$0xff] %v2066
    %2633 = vst [vmem:[%s2206] ss:$9 sm:$0xff] %v2067
    %2634 = vst [vmem:[%s2208] ss:$9 sm:$0xff] %v2068
    %2635 = vst [vmem:[%s2210] ss:$9 sm:$0xff] %v2069
    %2636 = vst [vmem:[%s2212] ss:$9 sm:$0xff] %v2070
    %v2637 = vld [vmem:[#allocation1] sm:$0xff]
    %2638 = vst [vmem:[#allocation1] ss:$9 sm:$0xff] %v2071
    %2639 = vst [vmem:[%s2200] ss:$9 sm:$0xff] %v2072
    %2640 = vst [vmem:[%s2202] ss:$9 sm:$0xff] %v2073
    %2641 = vst [vmem:[%s2204] ss:$9 sm:$0xff] %v2074
    %2642 = vst [vmem:[%s2206] ss:$9 sm:$0xff] %v2075
    %2643 = vst [vmem:[%s2208] ss:$9 sm:$0xff] %v2076
    %2644 = vst [vmem:[%s2210] ss:$9 sm:$0xff] %v2077
    %2645 = vst [vmem:[%s2212] ss:$9 sm:$0xff] %v2078
    %v2646 = vld [vmem:[#allocation1] sm:$0xff]
    %2647 = vst [vmem:[#allocation1] ss:$9 sm:$0xff] %v2079
    %2648 = vst [vmem:[%s2200] ss:$9 sm:$0xff] %v2080
    %2649 = vst [vmem:[%s2202] ss:$9 sm:$0xff] %v2081
    %2650 = vst [vmem:[%s2204] ss:$9 sm:$0xff] %v2082
    %2651 = vst [vmem:[%s2206] ss:$9 sm:$0xff] %v2083
    %2652 = vst [vmem:[%s2208] ss:$9 sm:$0xff] %v2084
    %2653 = vst [vmem:[%s2210] ss:$9 sm:$0xff] %v2085
    %2654 = vst [vmem:[%s2212] ss:$9 sm:$0xff] %v2086
    %v2655 = vld [vmem:[#allocation1] sm:$0xff]
    %2656 = vst [vmem:[#allocation1] ss:$9 sm:$0xff] %v2087
    %2657 = vst [vmem:[%s2200] ss:$9 sm:$0xff] %v2088
    %2658 = vst [vmem:[%s2202] ss:$9 sm:$0xff] %v2089
    %2659 = vst [vmem:[%s2204] ss:$9 sm:$0xff] %v2090
    %2660 = vst [vmem:[%s2206] ss:$9 sm:$0xff] %v2091
    %2661 = vst [vmem:[%s2208] ss:$9 sm:$0xff] %v2092
    %2662 = vst [vmem:[%s2210] ss:$9 sm:$0xff] %v2093
    %2663 = vst [vmem:[%s2212] ss:$9 sm:$0xff] %v2094
    %v2664 = vld [vmem:[#allocation1] sm:$0xff]
    %2665 = vst [vmem:[#allocation1] ss:$9 sm:$0xff] %v2095
    %2666 = vst [vmem:[%s2200] ss:$9 sm:$0xff] %v2096
    %2667 = vst [vmem:[%s2202] ss:$9 sm:$0xff] %v2097
    %2668 = vst [vmem:[%s2204] ss:$9 sm:$0xff] %v2098
    %2669 = vst [vmem:[%s2206] ss:$9 sm:$0xff] %v2099
    %2670 = vst [vmem:[%s2208] ss:$9 sm:$0xff] %v2100
    %2671 = vst [vmem:[%s2210] ss:$9 sm:$0xff] %v2101
    %2672 = vst [vmem:[%s2212] ss:$9 sm:$0xff] %v2102
    %v2673 = vld [vmem:[#allocation1] sm:$0xff]
    %2674 = vst [vmem:[#allocation1] ss:$9 sm:$0xff] %v2103
    %2675 = vst [vmem:[%s2200] ss:$9 sm:$0xff] %v2104
    %2676 = vst [vmem:[%s2202] ss:$9 sm:$0xff] %v2105
    %2677 = vst [vmem:[%s2204] ss:$9 sm:$0xff] %v2106
    %2678 = vst [vmem:[%s2206] ss:$9 sm:$0xff] %v2107
    %2679 = vst [vmem:[%s2208] ss:$9 sm:$0xff] %v2108
    %2680 = vst [vmem:[%s2210] ss:$9 sm:$0xff] %v2109
    %2681 = vst [vmem:[%s2212] ss:$9 sm:$0xff] %v2110
    %v2682 = vld [vmem:[#allocation1] sm:$0xff]
    %2683 = vst [vmem:[#allocation1] ss:$9 sm:$0xff] %v2111
    %2684 = vst [vmem:[%s2200] ss:$9 sm:$0xff] %v2112
    %2685 = vst [vmem:[%s2202] ss:$9 sm:$0xff] %v2113
    %2686 = vst [vmem:[%s2204] ss:$9 sm:$0xff] %v2114
    %2687 = vst [vmem:[%s2206] ss:$9 sm:$0xff] %v2115
    %2688 = vst [vmem:[%s2208] ss:$9 sm:$0xff] %v2116
    %2689 = vst [vmem:[%s2210] ss:$9 sm:$0xff] %v2117
    %2690 = vst [vmem:[%s2212] ss:$9 sm:$0xff] %v2118
    %v2691 = vld [vmem:[#allocation1] sm:$0xff]
    %2692 = vst [vmem:[#allocation1] ss:$9 sm:$0xff] %v2119
    %2693 = vst [vmem:[%s2200] ss:$9 sm:$0xff] %v2120
    %2694 = vst [vmem:[%s2202] ss:$9 sm:$0xff] %v2121
    %2695 = vst [vmem:[%s2204] ss:$9 sm:$0xff] %v2122
    %2696 = vst [vmem:[%s2206] ss:$9 sm:$0xff] %v2123
    %2697 = vst [vmem:[%s2208] ss:$9 sm:$0xff] %v2124
    %2698 = vst [vmem:[%s2210] ss:$9 sm:$0xff] %v2125
    %2699 = vst [vmem:[%s2212] ss:$9 sm:$0xff] %v2126
    %v2700 = vld [vmem:[#allocation1] sm:$0xff]
    %2701 = vst [vmem:[#allocation1] ss:$9 sm:$0xff] %v2127
    %2702 = vst [vmem:[%s2200] ss:$9 sm:$0xff] %v2128
    %2703 = vst [vmem:[%s2202] ss:$9 sm:$0xff] %v2129
    %2704 = vst [vmem:[%s2204] ss:$9 sm:$0xff] %v2130
    %2705 = vst [vmem:[%s2206] ss:$9 sm:$0xff] %v2131
    %2706 = vst [vmem:[%s2208] ss:$9 sm:$0xff] %v2132
    %2707 = vst [vmem:[%s2210] ss:$9 sm:$0xff] %v2133
    %2708 = vst [vmem:[%s2212] ss:$9 sm:$0xff] %v2134
    %v2709 = vld [vmem:[#allocation1] sm:$0xff]
    %2710 = vst [vmem:[#allocation1] ss:$9 sm:$0xff] %v2135
    %2711 = vst [vmem:[%s2200] ss:$9 sm:$0xff] %v2136
    %2712 = vst [vmem:[%s2202] ss:$9 sm:$0xff] %v2137
    %2713 = vst [vmem:[%s2204] ss:$9 sm:$0xff] %v2138
    %2714 = vst [vmem:[%s2206] ss:$9 sm:$0xff] %v2139
    %2715 = vst [vmem:[%s2208] ss:$9 sm:$0xff] %v2140
    %2716 = vst [vmem:[%s2210] ss:$9 sm:$0xff] %v2141
    %2717 = vst [vmem:[%s2212] ss:$9 sm:$0xff] %v2142
    %v2718 = vld [vmem:[#allocation1] sm:$0xff]
    %2719 = vst [vmem:[#allocation1] ss:$9 sm:$0xff] %v2143
    %2720 = vst [vmem:[%s2200] ss:$9 sm:$0xff] %v2144
    %2721 = vst [vmem:[%s2202] ss:$9 sm:$0xff] %v2145
    %2722 = vst [vmem:[%s2204] ss:$9 sm:$0xff] %v2146
    %2723 = vst [vmem:[%s2206] ss:$9 sm:$0xff] %v2147
    %2724 = vst [vmem:[%s2208] ss:$9 sm:$0xff] %v2148
    %2725 = vst [vmem:[%s2210] ss:$9 sm:$0xff] %v2149
    %2726 = vst [vmem:[%s2212] ss:$9 sm:$0xff] %v2150
    %v2727 = vld [vmem:[#allocation1] sm:$0xff]
    %2728 = vst [vmem:[#allocation1] ss:$9 sm:$0xff] %v2151
    %2729 = vst [vmem:[%s2200] ss:$9 sm:$0xff] %v2152
    %2730 = vst [vmem:[%s2202] ss:$9 sm:$0xff] %v2153
    %2731 = vst [vmem:[%s2204] ss:$9 sm:$0xff] %v2154
    %2732 = vst [vmem:[%s2206] ss:$9 sm:$0xff] %v2155
    %2733 = vst [vmem:[%s2208] ss:$9 sm:$0xff] %v2156
    %2734 = vst [vmem:[%s2210] ss:$9 sm:$0xff] %v2157
    %2735 = vst [vmem:[%s2212] ss:$9 sm:$0xff] %v2158
    %v2736 = vld [vmem:[#allocation1] sm:$0xff]
    %2737 = vst [vmem:[#allocation1] ss:$9 sm:$0xff] %v2159
    %2738 = vst [vmem:[%s2200] ss:$9 sm:$0xff] %v2160
    %2739 = vst [vmem:[%s2202] ss:$9 sm:$0xff] %v2161
    %2740 = vst [vmem:[%s2204] ss:$9 sm:$0xff] %v2162
    %2741 = vst [vmem:[%s2206] ss:$9 sm:$0xff] %v2163
    %2742 = vst [vmem:[%s2208] ss:$9 sm:$0xff] %v2164
    %2743 = vst [vmem:[%s2210] ss:$9 sm:$0xff] %v2165
    %2744 = vst [vmem:[%s2212] ss:$9 sm:$0xff] %v2166
    %v2745 = vld [vmem:[#allocation1] sm:$0xff]
    %2746 = vst [vmem:[#allocation1] ss:$9 sm:$0xff] %v2167
    %2747 = vst [vmem:[%s2200] ss:$9 sm:$0xff] %v2168
    %2748 = vst [vmem:[%s2202] ss:$9 sm:$0xff] %v2169
    %2749 = vst [vmem:[%s2204] ss:$9 sm:$0xff] %v2170
    %2750 = vst [vmem:[%s2206] ss:$9 sm:$0xff] %v2171
    %2751 = vst [vmem:[%s2208] ss:$9 sm:$0xff] %v2172
    %2752 = vst [vmem:[%s2210] ss:$9 sm:$0xff] %v2173
    %2753 = vst [vmem:[%s2212] ss:$9 sm:$0xff] %v2174
    %v2754 = vld [vmem:[#allocation1] sm:$0xff]
    %2755 = vst [vmem:[#allocation1] ss:$9 sm:$0xff] %v2175
    %2756 = vst [vmem:[%s2200] ss:$9 sm:$0xff] %v2176
    %2757 = vst [vmem:[%s2202] ss:$9 sm:$0xff] %v2177
    %2758 = vst [vmem:[%s2204] ss:$9 sm:$0xff] %v2178
    %2759 = vst [vmem:[%s2206] ss:$9 sm:$0xff] %v2179
    %2760 = vst [vmem:[%s2208] ss:$9 sm:$0xff] %v2180
    %2761 = vst [vmem:[%s2210] ss:$9 sm:$0xff] %v2181
    %2762 = vst [vmem:[%s2212] ss:$9 sm:$0xff] %v2182
    %v2763 = vld [vmem:[#allocation1] sm:$0xff]
    %2764 = vst [vmem:[#allocation1] ss:$9 sm:$0xff] %v2183
    %2765 = vst [vmem:[%s2200] ss:$9 sm:$0xff] %v2184
    %2766 = vst [vmem:[%s2202] ss:$9 sm:$0xff] %v2185
    %2767 = vst [vmem:[%s2204] ss:$9 sm:$0xff] %v2186
    %2768 = vst [vmem:[%s2206] ss:$9 sm:$0xff] %v2187
    %2769 = vst [vmem:[%s2208] ss:$9 sm:$0xff] %v2188
    %2770 = vst [vmem:[%s2210] ss:$9 sm:$0xff] %v2189
    %2771 = vst [vmem:[%s2212] ss:$9 sm:$0xff] %v2190
    %v2772 = vld [vmem:[#allocation1] sm:$0xff]
    %2773 = vst [vmem:[#allocation1] ss:$9 sm:$0xff] %v2191
    %2774 = vst [vmem:[%s2200] ss:$9 sm:$0xff] %v2192
    %2775 = vst [vmem:[%s2202] ss:$9 sm:$0xff] %v2193
    %2776 = vst [vmem:[%s2204] ss:$9 sm:$0xff] %v2194
    %2777 = vst [vmem:[%s2206] ss:$9 sm:$0xff] %v2195
    %2778 = vst [vmem:[%s2208] ss:$9 sm:$0xff] %v2196
    %2779 = vst [vmem:[%s2210] ss:$9 sm:$0xff] %v2197
    %2780 = vst [vmem:[%s2212] ss:$9 sm:$0xff] %v2198
    %v2781 = vld [vmem:[#allocation1] sm:$0xff]
    %2782 = vset.pattern.permute.xlu0 0
    %2783 = vperm.xlu0 %2782, %v2214
    %v2784 = vpop.permute.xlu0 %2783
    %2785 = vset.pattern.permute.xlu0 0
    %2786 = vperm.xlu0 %2785, %v2223
    %v2787 = vpop.permute.xlu0 %2786
    %2788 = vset.pattern.permute.xlu0 0
    %2789 = vperm.xlu0 %2788, %v2232
    %v2790 = vpop.permute.xlu0 %2789
    %2791 = vset.pattern.permute.xlu0 0
    %2792 = vperm.xlu0 %2791, %v2241
    %v2793 = vpop.permute.xlu0 %2792
    %2794 = vset.pattern.permute.xlu0 0
    %2795 = vperm.xlu0 %2794, %v2250
    %v2796 = vpop.permute.xlu0 %2795
    %2797 = vset.pattern.permute.xlu0 0
    %2798 = vperm.xlu0 %2797, %v2259
    %v2799 = vpop.permute.xlu0 %2798
    %2800 = vset.pattern.permute.xlu0 0
    %2801 = vperm.xlu0 %2800, %v2268
    %v2802 = vpop.permute.xlu0 %2801
    %2803 = vset.pattern.permute.xlu0 0
    %2804 = vperm.xlu0 %2803, %v2277
    %v2805 = vpop.permute.xlu0 %2804
    %2806 = vset.pattern.permute.xlu0 0
    %2807 = vperm.xlu0 %2806, %v2286
    %v2808 = vpop.permute.xlu0 %2807
    %2809 = vset.pattern.permute.xlu0 0
    %2810 = vperm.xlu0 %2809, %v2295
    %v2811 = vpop.permute.xlu0 %2810
    %2812 = vset.pattern.permute.xlu0 0
    %2813 = vperm.xlu0 %2812, %v2304
    %v2814 = vpop.permute.xlu0 %2813
    %2815 = vset.pattern.permute.xlu0 0
    %2816 = vperm.xlu0 %2815, %v2313
    %v2817 = vpop.permute.xlu0 %2816
    %2818 = vset.pattern.permute.xlu0 0
    %2819 = vperm.xlu0 %2818, %v2322
    %v2820 = vpop.permute.xlu0 %2819
    %2821 = vset.pattern.permute.xlu0 0
    %2822 = vperm.xlu0 %2821, %v2331
    %v2823 = vpop.permute.xlu0 %2822
    %2824 = vset.pattern.permute.xlu0 0
    %2825 = vperm.xlu0 %2824, %v2340
    %v2826 = vpop.permute.xlu0 %2825
    %2827 = vset.pattern.permute.xlu0 0
    %2828 = vperm.xlu0 %2827, %v2349
    %v2829 = vpop.permute.xlu0 %2828
    %2830 = vset.pattern.permute.xlu0 0
    %2831 = vperm.xlu0 %2830, %v2358
    %v2832 = vpop.permute.xlu0 %2831
    %2833 = vset.pattern.permute.xlu0 0
    %2834 = vperm.xlu0 %2833, %v2367
    %v2835 = vpop.permute.xlu0 %2834
    %2836 = vset.pattern.permute.xlu0 0
    %2837 = vperm.xlu0 %2836, %v2376
    %v2838 = vpop.permute.xlu0 %2837
    %2839 = vset.pattern.permute.xlu0 0
    %2840 = vperm.xlu0 %2839, %v2385
    %v2841 = vpop.permute.xlu0 %2840
    %2842 = vset.pattern.permute.xlu0 0
    %2843 = vperm.xlu0 %2842, %v2394
    %v2844 = vpop.permute.xlu0 %2843
    %2845 = vset.pattern.permute.xlu0 0
    %2846 = vperm.xlu0 %2845, %v2403
    %v2847 = vpop.permute.xlu0 %2846
    %2848 = vset.pattern.permute.xlu0 0
    %2849 = vperm.xlu0 %2848, %v2412
    %v2850 = vpop.permute.xlu0 %2849
    %2851 = vset.pattern.permute.xlu0 0
    %2852 = vperm.xlu0 %2851, %v2421
    %v2853 = vpop.permute.xlu0 %2852
    %2854 = vset.pattern.permute.xlu0 0
    %2855 = vperm.xlu0 %2854, %v2430
    %v2856 = vpop.permute.xlu0 %2855
    %2857 = vset.pattern.permute.xlu0 0
    %2858 = vperm.xlu0 %2857, %v2439
    %v2859 = vpop.permute.xlu0 %2858
    %2860 = vset.pattern.permute.xlu0 0
    %2861 = vperm.xlu0 %2860, %v2448
    %v2862 = vpop.permute.xlu0 %2861
    %2863 = vset.pattern.permute.xlu0 0
    %2864 = vperm.xlu0 %2863, %v2457
    %v2865 = vpop.permute.xlu0 %2864
    %2866 = vset.pattern.permute.xlu0 0
    %2867 = vperm.xlu0 %2866, %v2466
    %v2868 = vpop.permute.xlu0 %2867
    %2869 = vset.pattern.permute.xlu0 0
    %2870 = vperm.xlu0 %2869, %v2475
    %v2871 = vpop.permute.xlu0 %2870
    %2872 = vset.pattern.permute.xlu0 0
    %2873 = vperm.xlu0 %2872, %v2484
    %v2874 = vpop.permute.xlu0 %2873
    %2875 = vset.pattern.permute.xlu0 0
    %2876 = vperm.xlu0 %2875, %v2493
    %v2877 = vpop.permute.xlu0 %2876
    %2878 = vset.pattern.permute.xlu0 0
    %2879 = vperm.xlu0 %2878, %v2502
    %v2880 = vpop.permute.xlu0 %2879
    %2881 = vset.pattern.permute.xlu0 0
    %2882 = vperm.xlu0 %2881, %v2511
    %v2883 = vpop.permute.xlu0 %2882
    %2884 = vset.pattern.permute.xlu0 0
    %2885 = vperm.xlu0 %2884, %v2520
    %v2886 = vpop.permute.xlu0 %2885
    %2887 = vset.pattern.permute.xlu0 0
    %2888 = vperm.xlu0 %2887, %v2529
    %v2889 = vpop.permute.xlu0 %2888
    %2890 = vset.pattern.permute.xlu0 0
    %2891 = vperm.xlu0 %2890, %v2538
    %v2892 = vpop.permute.xlu0 %2891
    %2893 = vset.pattern.permute.xlu0 0
    %2894 = vperm.xlu0 %2893, %v2547
    %v2895 = vpop.permute.xlu0 %2894
    %2896 = vset.pattern.permute.xlu0 0
    %2897 = vperm.xlu0 %2896, %v2556
    %v2898 = vpop.permute.xlu0 %2897
    %2899 = vset.pattern.permute.xlu0 0
    %2900 = vperm.xlu0 %2899, %v2565
    %v2901 = vpop.permute.xlu0 %2900
    %2902 = vset.pattern.permute.xlu0 0
    %2903 = vperm.xlu0 %2902, %v2574
    %v2904 = vpop.permute.xlu0 %2903
    %2905 = vset.pattern.permute.xlu0 0
    %2906 = vperm.xlu0 %2905, %v2583
    %v2907 = vpop.permute.xlu0 %2906
    %2908 = vset.pattern.permute.xlu0 0
    %2909 = vperm.xlu0 %2908, %v2592
    %v2910 = vpop.permute.xlu0 %2909
    %2911 = vset.pattern.permute.xlu0 0
    %2912 = vperm.xlu0 %2911, %v2601
    %v2913 = vpop.permute.xlu0 %2912
    %2914 = vset.pattern.permute.xlu0 0
    %2915 = vperm.xlu0 %2914, %v2610
    %v2916 = vpop.permute.xlu0 %2915
    %2917 = vset.pattern.permute.xlu0 0
    %2918 = vperm.xlu0 %2917, %v2619
    %v2919 = vpop.permute.xlu0 %2918
    %2920 = vset.pattern.permute.xlu0 0
    %2921 = vperm.xlu0 %2920, %v2628
    %v2922 = vpop.permute.xlu0 %2921
    %2923 = vset.pattern.permute.xlu0 0
    %2924 = vperm.xlu0 %2923, %v2637
    %v2925 = vpop.permute.xlu0 %2924
    %2926 = vset.pattern.permute.xlu0 0
    %2927 = vperm.xlu0 %2926, %v2646
    %v2928 = vpop.permute.xlu0 %2927
    %2929 = vset.pattern.permute.xlu0 0
    %2930 = vperm.xlu0 %2929, %v2655
    %v2931 = vpop.permute.xlu0 %2930
    %2932 = vset.pattern.permute.xlu0 0
    %2933 = vperm.xlu0 %2932, %v2664
    %v2934 = vpop.permute.xlu0 %2933
    %2935 = vset.pattern.permute.xlu0 0
    %2936 = vperm.xlu0 %2935, %v2673
    %v2937 = vpop.permute.xlu0 %2936
    %2938 = vset.pattern.permute.xlu0 0
    %2939 = vperm.xlu0 %2938, %v2682
    %v2940 = vpop.permute.xlu0 %2939
    %2941 = vset.pattern.permute.xlu0 0
    %2942 = vperm.xlu0 %2941, %v2691
    %v2943 = vpop.permute.xlu0 %2942
    %2944 = vset.pattern.permute.xlu0 0
    %2945 = vperm.xlu0 %2944, %v2700
    %v2946 = vpop.permute.xlu0 %2945
    %2947 = vset.pattern.permute.xlu0 0
    %2948 = vperm.xlu0 %2947, %v2709
    %v2949 = vpop.permute.xlu0 %2948
    %2950 = vset.pattern.permute.xlu0 0
    %2951 = vperm.xlu0 %2950, %v2718
    %v2952 = vpop.permute.xlu0 %2951
    %2953 = vset.pattern.permute.xlu0 0
    %2954 = vperm.xlu0 %2953, %v2727
    %v2955 = vpop.permute.xlu0 %2954
    %2956 = vset.pattern.permute.xlu0 0
    %2957 = vperm.xlu0 %2956, %v2736
    %v2958 = vpop.permute.xlu0 %2957
    %2959 = vset.pattern.permute.xlu0 0
    %2960 = vperm.xlu0 %2959, %v2745
    %v2961 = vpop.permute.xlu0 %2960
    %2962 = vset.pattern.permute.xlu0 0
    %2963 = vperm.xlu0 %2962, %v2754
    %v2964 = vpop.permute.xlu0 %2963
    %2965 = vset.pattern.permute.xlu0 0
    %2966 = vperm.xlu0 %2965, %v2763
    %v2967 = vpop.permute.xlu0 %2966
    %2968 = vset.pattern.permute.xlu0 0
    %2969 = vperm.xlu0 %2968, %v2772
    %v2970 = vpop.permute.xlu0 %2969
    %2971 = vset.pattern.permute.xlu0 0
    %2972 = vperm.xlu0 %2971, %v2781
    %v2973 = vpop.permute.xlu0 %2972
    %v2974 = vlaneseq
    %v2975 = vand.u32 %v2974, 127
    %v2976 = vperm.slane %v2784, %v2975
    %v2977 = vadd.s32 %v2975, 4294967288
    %v2978 = vperm.slane %v2787, %v2977
    %vm2979 = vcmask 130112
    %v2980 = vsel %vm2979, %v2978, %v2976
    %v2981 = vadd.s32 %v2975, 4294967280
    %v2982 = vperm.slane %v2790, %v2981
    %vm2983 = vcmask 195712
    %v2984 = vsel %vm2983, %v2982, %v2980
    %v2985 = vadd.s32 %v2975, 4294967272
    %v2986 = vperm.slane %v2793, %v2985
    %vm2987 = vcmask 261312
    %v2988 = vsel %vm2987, %v2986, %v2984
    %v2989 = vadd.s32 %v2975, 4294967264
    %v2990 = vperm.slane %v2796, %v2989
    %vm2991 = vcmask 326912
    %v2992 = vsel %vm2991, %v2990, %v2988
    %v2993 = vadd.s32 %v2975, 4294967256
    %v2994 = vperm.slane %v2799, %v2993
    %vm2995 = vcmask 392512
    %v2996 = vsel %vm2995, %v2994, %v2992
    %v2997 = vadd.s32 %v2975, 4294967248
    %v2998 = vperm.slane %v2802, %v2997
    %vm2999 = vcmask 458112
    %v3000 = vsel %vm2999, %v2998, %v2996
    %v3001 = vadd.s32 %v2975, 4294967240
    %v3002 = vperm.slane %v2805, %v3001
    %vm3003 = vcmask 523712
    %v3004 = vsel %vm3003, %v3002, %v3000
    %v3005 = vadd.s32 %v2975, 4294967232
    %v3006 = vperm.slane %v2808, %v3005
    %vm3007 = vcmask 589312
    %v3008 = vsel %vm3007, %v3006, %v3004
    %v3009 = vadd.s32 %v2975, 4294967224
    %v3010 = vperm.slane %v2811, %v3009
    %vm3011 = vcmask 654912
    %v3012 = vsel %vm3011, %v3010, %v3008
    %v3013 = vadd.s32 %v2975, 4294967216
    %v3014 = vperm.slane %v2814, %v3013
    %vm3015 = vcmask 720512
    %v3016 = vsel %vm3015, %v3014, %v3012
    %v3017 = vadd.s32 %v2975, 4294967208
    %v3018 = vperm.slane %v2817, %v3017
    %vm3019 = vcmask 786112
    %v3020 = vsel %vm3019, %v3018, %v3016
    %v3021 = vadd.s32 %v2975, 4294967200
    %v3022 = vperm.slane %v2820, %v3021
    %vm3023 = vcmask 851712
    %v3024 = vsel %vm3023, %v3022, %v3020
    %v3025 = vadd.s32 %v2975, 4294967192
    %v3026 = vperm.slane %v2823, %v3025
    %vm3027 = vcmask 917312
    %v3028 = vsel %vm3027, %v3026, %v3024
    %v3029 = vadd.s32 %v2975, 4294967184
    %v3030 = vperm.slane %v2826, %v3029
    %vm3031 = vcmask 982912
    %v3032 = vsel %vm3031, %v3030, %v3028
    %v3033 = vadd.s32 %v2975, 4294967176
    %v3034 = vperm.slane %v2829, %v3033
    %vm3035 = vcmask 1048512
    %v3036 = vsel %vm3035, %v3034, %v3032
    %v3037 = vperm.slane %v2832, %v2975
    %v3038 = vperm.slane %v2835, %v2977
    %v3039 = vsel %vm2979, %v3038, %v3037
    %v3040 = vperm.slane %v2838, %v2981
    %v3041 = vsel %vm2983, %v3040, %v3039
    %v3042 = vperm.slane %v2841, %v2985
    %v3043 = vsel %vm2987, %v3042, %v3041
    %v3044 = vperm.slane %v2844, %v2989
    %v3045 = vsel %vm2991, %v3044, %v3043
    %v3046 = vperm.slane %v2847, %v2993
    %v3047 = vsel %vm2995, %v3046, %v3045
    %v3048 = vperm.slane %v2850, %v2997
    %v3049 = vsel %vm2999, %v3048, %v3047
    %v3050 = vperm.slane %v2853, %v3001
    %v3051 = vsel %vm3003, %v3050, %v3049
    %v3052 = vperm.slane %v2856, %v3005
    %v3053 = vsel %vm3007, %v3052, %v3051
    %v3054 = vperm.slane %v2859, %v3009
    %v3055 = vsel %vm3011, %v3054, %v3053
    %v3056 = vperm.slane %v2862, %v3013
    %v3057 = vsel %vm3015, %v3056, %v3055
    %v3058 = vperm.slane %v2865, %v3017
    %v3059 = vsel %vm3019, %v3058, %v3057
    %v3060 = vperm.slane %v2868, %v3021
    %v3061 = vsel %vm3023, %v3060, %v3059
    %v3062 = vperm.slane %v2871, %v3025
    %v3063 = vsel %vm3027, %v3062, %v3061
    %v3064 = vperm.slane %v2874, %v3029
    %v3065 = vsel %vm3031, %v3064, %v3063
    %v3066 = vperm.slane %v2877, %v3033
    %v3067 = vsel %vm3035, %v3066, %v3065
    %v3068 = vperm.slane %v2880, %v2975
    %v3069 = vperm.slane %v2883, %v2977
    %v3070 = vsel %vm2979, %v3069, %v3068
    %v3071 = vperm.slane %v2886, %v2981
    %v3072 = vsel %vm2983, %v3071, %v3070
    %v3073 = vperm.slane %v2889, %v2985
    %v3074 = vsel %vm2987, %v3073, %v3072
    %v3075 = vperm.slane %v2892, %v2989
    %v3076 = vsel %vm2991, %v3075, %v3074
    %v3077 = vperm.slane %v2895, %v2993
    %v3078 = vsel %vm2995, %v3077, %v3076
    %v3079 = vperm.slane %v2898, %v2997
    %v3080 = vsel %vm2999, %v3079, %v3078
    %v3081 = vperm.slane %v2901, %v3001
    %v3082 = vsel %vm3003, %v3081, %v3080
    %v3083 = vperm.slane %v2904, %v3005
    %v3084 = vsel %vm3007, %v3083, %v3082
    %v3085 = vperm.slane %v2907, %v3009
    %v3086 = vsel %vm3011, %v3085, %v3084
    %v3087 = vperm.slane %v2910, %v3013
    %v3088 = vsel %vm3015, %v3087, %v3086
    %v3089 = vperm.slane %v2913, %v3017
    %v3090 = vsel %vm3019, %v3089, %v3088
    %v3091 = vperm.slane %v2916, %v3021
    %v3092 = vsel %vm3023, %v3091, %v3090
    %v3093 = vperm.slane %v2919, %v3025
    %v3094 = vsel %vm3027, %v3093, %v3092
    %v3095 = vperm.slane %v2922, %v3029
    %v3096 = vsel %vm3031, %v3095, %v3094
    %v3097 = vperm.slane %v2925, %v3033
    %v3098 = vsel %vm3035, %v3097, %v3096
    %v3099 = vperm.slane %v2928, %v2975
    %v3100 = vperm.slane %v2931, %v2977
    %v3101 = vsel %vm2979, %v3100, %v3099
    %v3102 = vperm.slane %v2934, %v2981
    %v3103 = vsel %vm2983, %v3102, %v3101
    %v3104 = vperm.slane %v2937, %v2985
    %v3105 = vsel %vm2987, %v3104, %v3103
    %v3106 = vperm.slane %v2940, %v2989
    %v3107 = vsel %vm2991, %v3106, %v3105
    %v3108 = vperm.slane %v2943, %v2993
    %v3109 = vsel %vm2995, %v3108, %v3107
    %v3110 = vperm.slane %v2946, %v2997
    %v3111 = vsel %vm2999, %v3110, %v3109
    %v3112 = vperm.slane %v2949, %v3001
    %v3113 = vsel %vm3003, %v3112, %v3111
    %v3114 = vperm.slane %v2952, %v3005
    %v3115 = vsel %vm3007, %v3114, %v3113
    %v3116 = vperm.slane %v2955, %v3009
    %v3117 = vsel %vm3011, %v3116, %v3115
    %v3118 = vperm.slane %v2958, %v3013
    %v3119 = vsel %vm3015, %v3118, %v3117
    %v3120 = vperm.slane %v2961, %v3017
    %v3121 = vsel %vm3019, %v3120, %v3119
    %v3122 = vperm.slane %v2964, %v3021
    %v3123 = vsel %vm3023, %v3122, %v3121
    %v3124 = vperm.slane %v2967, %v3025
    %v3125 = vsel %vm3027, %v3124, %v3123
    %v3126 = vperm.slane %v2970, %v3029
    %v3127 = vsel %vm3031, %v3126, %v3125
    %v3128 = vperm.slane %v2973, %v3033
    %v3129 = vsel %vm3035, %v3128, %v3127
    %v3130 = vrot.slane %v3067, 7
    %v3131 = vrot.slane %v3098, 6
    %v3132 = vrot.slane %v3129, 5
    %vm3133 = vcmask 1040384
    %v3134 = vsel %vm3133, %v3036, %v3130
    %vm3135 = vcmask 1042434
    %v3136 = vsel %vm3135, %v3131, %v3132
    %vm3137 = vcmask 1041408
    %v3138 = vsel %vm3137, %v3134, %v3136
    %v3140 = vlaneseq
    %vm3141 = vcmp.ge.s32.totalorder %v3140, 0
    %vm3142 = vcmp.lt.s32.totalorder %v3140, 512
    %vm3143 = vmand %vm3141, %vm3142
    %3144 = vst.msk [vmem:[#allocation3] sm:$0xf] %vm3143, %v3138
    // Predicated region
    $region14: #{tpu_custom_call.1} parent=1 // pred_check
      _
    $region15: #{tpu_custom_call.1} parent=1 // pred_check_branch
      %3146 = sbr.rel (0) target = $region17
    $region16: #{tpu_custom_call.1} parent=1 // pred_region
      %3148 = vsyncadd [#allocation4], 0
      %s3150 = sshll.u32 [#allocation3], 4
      %s3151 = int_to_ptr.vmem [resolvable:$true] %s3150
      %s3152 = sshll.u32 %s3, 4
      %s3153 = int_to_ptr.hbm [resolvable:$true] %s3152
      %3155 = dma.vmem_to_hbm [thread:$0]  %s3151, 64, %s3153, [#allocation4]
    $region17: #{tpu_custom_call.1} parent=1 // pred_fallthru
      _
    // Predicated region
    $region18: #{tpu_custom_call.1} parent=1 // pred_check
      _
    $region19: #{tpu_custom_call.1} parent=1 // pred_check_branch
      %3157 = sbr.rel (0) target = $region21
    $region20: #{tpu_custom_call.1} parent=1 // pred_region
      %3159 = dma.done [#allocation4], 64
    $region21: #{tpu_custom_call.1} parent=1 // pred_fallthru
      _
    %3160 = vsyncpa [#allocation4], 1

</llo_original>
